<compile_context>
chip_gen: v5e
topology: v5e:2x2
jax: 0.10.0
libtpu: 0.0.40
codegen_flags: <defaults>
</compile_context>

<pallas_src>
import functools

import jax
import jax.numpy as jnp
from jax.experimental import pallas as pl
from jax.experimental.pallas import tpu as pltpu


# ----------------------------- fused forward kernel -----------------------------
def _fused_bilstm_tagger_kernel(
    # inputs
    ids_ref,      # (T*B, 1) int32, time-major flattened token ids
    emb_ref,      # (V, E)   embedding table
    wih_f_ref,    # (E, 4H)
    whh_f_ref,    # (H, 4H)
    b_f_ref,      # (1, 4H)
    wih_b_ref,    # (E, 4H)
    whh_b_ref,    # (H, 4H)
    b_b_ref,      # (1, 4H)
    wtag_f_ref,   # (H, tgt)  hidden2tag rows acting on the forward hidden half
    wtag_b_ref,   # (H, tgt)  hidden2tag rows acting on the backward hidden half
    b_tag_ref,    # (1, tgt)
    # output
    out_ref,      # (T, B, tgt)  time-major tag scores
    # scratch
    gxf_sc,       # (T, B, 4H)  precomputed input projections, forward dir
    gxb_sc,       # (T, B, 4H)  precomputed input projections, backward dir
    *, T, B,
):
    V, E = emb_ref.shape
    H = whh_f_ref.shape[0]
    tgt = out_ref.shape[-1]

    # ---- Embedding lookup for all tokens at once: one-hot @ table (MXU).
    # Avoids any gather lowering and keeps the table resident in VMEM.
    ids = ids_ref[...]                                                    # (T*B, 1)
    onehot = (ids == jax.lax.broadcasted_iota(jnp.int32, (T * B, V), 1)
              ).astype(jnp.float32)                                       # (T*B, V)
    x = jnp.dot(onehot, emb_ref[...], preferred_element_type=jnp.float32)  # (T*B, E)

    # ---- Precompute input projections (+combined bias) for both directions
    # with one matmul each; stash per-timestep slabs in 3-D scratch so the
    # recurrence only reads ref[s] (dynamic first-axis index) per step.
    gx_f = jnp.dot(x, wih_f_ref[...], preferred_element_type=jnp.float32) + b_f_ref[...]
    gx_b = jnp.dot(x, wih_b_ref[...], preferred_element_type=jnp.float32) + b_b_ref[...]
    for t in range(T):                      # static fill, executed once per call
        gxf_sc[t] = gx_f[t * B:(t + 1) * B, :]
        gxb_sc[t] = gx_b[t * B:(t + 1) * B, :]

    whh_f = whh_f_ref[...]
    whh_b = whh_b_ref[...]
    wtag_f = wtag_f_ref[...]
    wtag_b = wtag_b_ref[...]

    # Output starts as the hidden2tag bias; each direction then accumulates its
    # half of the (logically concatenated) hidden state's contribution per step.
    out_ref[...] = jnp.broadcast_to(b_tag_ref[...], (T, B, tgt))

    def gate_update(gates, c):
        # PyTorch gate order: i, f, g, o
        i = jax.nn.sigmoid(gates[:, 0:H])
        f = jax.nn.sigmoid(gates[:, H:2 * H])
        g = jnp.tanh(gates[:, 2 * H:3 * H])
        o = jax.nn.sigmoid(gates[:, 3 * H:4 * H])
        c_new = f * c + i * g
        h_new = o * jnp.tanh(c_new)
        return h_new, c_new

    def body(s, carry):
        h_f, c_f, h_b, c_b = carry
        tt = T - 1 - s                      # backward-direction time index
        # forward direction, time s
        g_f = gxf_sc[s] + jnp.dot(h_f, whh_f, preferred_element_type=jnp.float32)
        h_f, c_f = gate_update(g_f, c_f)
        # backward direction, time T-1-s (reversal via index math, no flipped copy)
        g_b = gxb_sc[tt] + jnp.dot(h_b, whh_b, preferred_element_type=jnp.float32)
        h_b, c_b = gate_update(g_b, c_b)
        # fused hidden2tag epilogue, accumulated in place
        out_ref[s] = out_ref[s] + jnp.dot(h_f, wtag_f,
                                          preferred_element_type=jnp.float32)
        out_ref[tt] = out_ref[tt] + jnp.dot(h_b, wtag_b,
                                            preferred_element_type=jnp.float32)
        return h_f, c_f, h_b, c_b

    zeros = jnp.zeros((B, H), jnp.float32)   # nn.LSTM default: zero initial state
    jax.lax.fori_loop(0, T, body, (zeros, zeros, zeros, zeros), unroll=True)


def _fused_forward(ids_tm, params, *, T, B):
    V, E = params["embedding"].shape
    H = params["w_hh_f"].shape[0]
    tgt = params["b_tag"].shape[-1]

    kernel = functools.partial(_fused_bilstm_tagger_kernel, T=T, B=B)

    def full(shape):
        return pl.BlockSpec(shape, lambda i, _s=shape: (0,) * len(_s))

    return pl.pallas_call(
        kernel,
        out_shape=jax.ShapeDtypeStruct((T, B, tgt), jnp.float32),
        grid=(1,),
        in_specs=[
            full((T * B, 1)),        # token ids (time-major)
            full((V, E)),            # embedding table
            full((E, 4 * H)), full((H, 4 * H)), full((1, 4 * H)),   # forward dir
            full((E, 4 * H)), full((H, 4 * H)), full((1, 4 * H)),   # backward dir
            full((H, tgt)), full((H, tgt)), full((1, tgt)),         # hidden2tag
        ],
        out_specs=full((T, B, tgt)),
        scratch_shapes=[
            pltpu.VMEM((T, B, 4 * H), jnp.float32),
            pltpu.VMEM((T, B, 4 * H), jnp.float32),
        ],
        compiler_params=pltpu.CompilerParams(dimension_semantics=("arbitrary",)),
    )(
        ids_tm,
        params["embedding"],
        params["w_ih_f"], params["w_hh_f"], params["b_f"],
        params["w_ih_b"], params["w_hh_b"], params["b_b"],
        params["w_tag_f"], params["w_tag_b"], params["b_tag"],
    )


# ----------------------------- full module forward -----------------------------
def lstm_module_forward(data, params):
    """data: (B, T) int32 token ids  ->  (B, T, target_size) float32"""
    B, T = data.shape
    # Tiny layout glue (64 B): flatten ids time-major so the kernel's per-step
    # slabs are contiguous rows.
    ids_tm = jnp.transpose(data).reshape(T * B, 1).astype(jnp.int32)
    out_tbd = _fused_forward(ids_tm, params, T=T, B=B)      # (T, B, tgt)
    return jnp.transpose(out_tbd, (1, 0, 2))                # (B, T, tgt)


# ----------------------------- parameter construction -----------------------------
def make_params(key, vocab_size, embedding_dim, hidden_dim, target_size):
    H = hidden_dim // 2  # per-direction hidden size (bidirectional)
    ks = jax.random.split(key, 12)
    s = 1.0 / jnp.sqrt(H)
    st = 1.0 / jnp.sqrt(hidden_dim)

    def u(k, shape, scale):
        return jax.random.uniform(k, shape, jnp.float32, -scale, scale)

    # hidden2tag: Linear(hidden_dim, target_size), stored transposed and split
    # into the rows acting on the forward / backward hidden halves.
    w_tag = u(ks[9], (hidden_dim, target_size), st)

    params = {
        "embedding": jax.random.normal(ks[0], (vocab_size, embedding_dim), jnp.float32),
        # weights stored transposed for (B,E)@(E,4H) / (B,H)@(H,4H) matmuls
        "w_ih_f": u(ks[1], (embedding_dim, 4 * H), s),
        "w_hh_f": u(ks[2], (H, 4 * H), s),
        "b_f": u(ks[3], (1, 4 * H), s) + u(ks[4], (1, 4 * H), s),   # b_ih + b_hh
        "w_ih_b": u(ks[5], (embedding_dim, 4 * H), s),
        "w_hh_b": u(ks[6], (H, 4 * H), s),
        "b_b": u(ks[7], (1, 4 * H), s) + u(ks[8], (1, 4 * H), s),
        "w_tag_f": w_tag[:H],
        "w_tag_b": w_tag[H:],
        "b_tag": u(ks[10], (1, target_size), st),
    }
    return params


if __name__ == "__main__":
    vocab_size = 20
    embedding_dim = 16      # len(embedding[0])
    hidden_dim = 32         # bidirectional -> 16 per direction
    target_size = 5         # len(tag_to_ix)
    batch, seq = 2, 8

    key = jax.random.PRNGKey(0)
    pkey, dkey = jax.random.split(key)
    params = make_params(pkey, vocab_size, embedding_dim, hidden_dim, target_size)
    data = jax.random.randint(dkey, (batch, seq), 0, vocab_size, dtype=jnp.int32)

    out = jax.jit(lstm_module_forward)(data, params)
    jax.block_until_ready(out)
    assert out.shape == (batch, seq, target_size)
    print("KERNEL_OK")
</pallas_src>

<mosaic_0001>
module attributes {stable_mosaic.version = 11 : i64} {
  func.func @_fused_bilstm_tagger_kernel(%arg0: i32, %arg1: memref<16x1xi32, #tpu.memory_space<vmem>>, %arg2: memref<20x16xf32, #tpu.memory_space<vmem>>, %arg3: memref<16x64xf32, #tpu.memory_space<vmem>>, %arg4: memref<16x64xf32, #tpu.memory_space<vmem>>, %arg5: memref<1x64xf32, #tpu.memory_space<vmem>>, %arg6: memref<16x64xf32, #tpu.memory_space<vmem>>, %arg7: memref<16x64xf32, #tpu.memory_space<vmem>>, %arg8: memref<1x64xf32, #tpu.memory_space<vmem>>, %arg9: memref<16x5xf32, #tpu.memory_space<vmem>>, %arg10: memref<16x5xf32, #tpu.memory_space<vmem>>, %arg11: memref<1x5xf32, #tpu.memory_space<vmem>>, %arg12: memref<8x2x5xf32, #tpu.memory_space<vmem>>, %arg13: memref<8x2x64xf32, #tpu.memory_space<vmem>>, %arg14: memref<8x2x64xf32, #tpu.memory_space<vmem>>) attributes {dimension_semantics = [#tpu.dimension_semantics<arbitrary>], iteration_bounds = array<i64: 1>, scalar_prefetch = 0 : i64, scratch_operands = 2 : i64, tpu.core_type = #tpu.core_type<tc>, window_params = [{pipeline_mode = #tpu.pipeline_mode<synchronous>, transform_indices = @transform_0, window_bounds = array<i64: 16, 1>}, {pipeline_mode = #tpu.pipeline_mode<synchronous>, transform_indices = @transform_1, window_bounds = array<i64: 20, 16>}, {pipeline_mode = #tpu.pipeline_mode<synchronous>, transform_indices = @transform_2, window_bounds = array<i64: 16, 64>}, {pipeline_mode = #tpu.pipeline_mode<synchronous>, transform_indices = @transform_3, window_bounds = array<i64: 16, 64>}, {pipeline_mode = #tpu.pipeline_mode<synchronous>, transform_indices = @transform_4, window_bounds = array<i64: 1, 64>}, {pipeline_mode = #tpu.pipeline_mode<synchronous>, transform_indices = @transform_5, window_bounds = array<i64: 16, 64>}, {pipeline_mode = #tpu.pipeline_mode<synchronous>, transform_indices = @transform_6, window_bounds = array<i64: 16, 64>}, {pipeline_mode = #tpu.pipeline_mode<synchronous>, transform_indices = @transform_7, window_bounds = array<i64: 1, 64>}, {pipeline_mode = #tpu.pipeline_mode<synchronous>, transform_indices = @transform_8, window_bounds = array<i64: 16, 5>}, {pipeline_mode = #tpu.pipeline_mode<synchronous>, transform_indices = @transform_9, window_bounds = array<i64: 16, 5>}, {pipeline_mode = #tpu.pipeline_mode<synchronous>, transform_indices = @transform_10, window_bounds = array<i64: 1, 5>}, {pipeline_mode = #tpu.pipeline_mode<synchronous>, transform_indices = @transform_11, window_bounds = array<i64: 8, 2, 5>}]} {
    %c0 = arith.constant 0 : index
    %c0_0 = arith.constant 0 : index
    %0 = vector.load %arg1[%c0, %c0_0] : memref<16x1xi32, #tpu.memory_space<vmem>>, vector<16x1xi32>
    %1 = tpu.iota {dimensions = array<i32: 1>} : vector<16x20xi32>
    %2 = vector.broadcast %0 : vector<16x1xi32> to vector<16x20xi32>
    %3 = arith.cmpi eq, %2, %1 : vector<16x20xi32>
    %4 = arith.extui %3 : vector<16x20xi1> to vector<16x20xi32>
    %5 = arith.sitofp %4 : vector<16x20xi32> to vector<16x20xf32>
    %c0_1 = arith.constant 0 : index
    %c0_2 = arith.constant 0 : index
    %6 = vector.load %arg2[%c0_1, %c0_2] : memref<20x16xf32, #tpu.memory_space<vmem>>, vector<20x16xf32>
    %cst = arith.constant dense<0.000000e+00> : vector<16x16xf32>
    %7 = tpu.matmul %5, %6, %cst {dimension_numbers = #tpu.dot_dimension_numbers<[1], [0], [0], [1], [0, 0, 1, 1], [], []>} : vector<16x20xf32>, vector<20x16xf32>, vector<16x16xf32> -> vector<16x16xf32>
    %c0_3 = arith.constant 0 : index
    %c0_4 = arith.constant 0 : index
    %8 = vector.load %arg3[%c0_3, %c0_4] : memref<16x64xf32, #tpu.memory_space<vmem>>, vector<16x64xf32>
    %cst_5 = arith.constant dense<0.000000e+00> : vector<16x64xf32>
    %9 = tpu.matmul %7, %8, %cst_5 {dimension_numbers = #tpu.dot_dimension_numbers<[1], [0], [0], [1], [0, 0, 1, 1], [], []>} : vector<16x16xf32>, vector<16x64xf32>, vector<16x64xf32> -> vector<16x64xf32>
    %c0_6 = arith.constant 0 : index
    %c0_7 = arith.constant 0 : index
    %10 = vector.load %arg5[%c0_6, %c0_7] : memref<1x64xf32, #tpu.memory_space<vmem>>, vector<1x64xf32>
    %11 = vector.broadcast %10 : vector<1x64xf32> to vector<16x64xf32>
    %12 = arith.addf %9, %11 : vector<16x64xf32>
    %c0_8 = arith.constant 0 : index
    %c0_9 = arith.constant 0 : index
    %13 = vector.load %arg6[%c0_8, %c0_9] : memref<16x64xf32, #tpu.memory_space<vmem>>, vector<16x64xf32>
    %cst_10 = arith.constant dense<0.000000e+00> : vector<16x64xf32>
    %14 = tpu.matmul %7, %13, %cst_10 {dimension_numbers = #tpu.dot_dimension_numbers<[1], [0], [0], [1], [0, 0, 1, 1], [], []>} : vector<16x16xf32>, vector<16x64xf32>, vector<16x64xf32> -> vector<16x64xf32>
    %c0_11 = arith.constant 0 : index
    %c0_12 = arith.constant 0 : index
    %15 = vector.load %arg8[%c0_11, %c0_12] : memref<1x64xf32, #tpu.memory_space<vmem>>, vector<1x64xf32>
    %16 = vector.broadcast %15 : vector<1x64xf32> to vector<16x64xf32>
    %17 = arith.addf %14, %16 : vector<16x64xf32>
    %18 = vector.extract_strided_slice %12 {offsets = [0, 0], sizes = [2, 64], strides = [1, 1]} : vector<16x64xf32> to vector<2x64xf32>
    %c0_13 = arith.constant 0 : index
    %c0_14 = arith.constant 0 : index
    %c0_15 = arith.constant 0 : index
    %19 = vector.load %arg13[%c0_13, %c0_14, %c0_15] : memref<8x2x64xf32, #tpu.memory_space<vmem>>, vector<1x2x64xf32>
    %20 = vector.shape_cast %19 : vector<1x2x64xf32> to vector<2x64xf32>
    %21 = vector.shape_cast %18 : vector<2x64xf32> to vector<1x2x64xf32>
    tpu.vector_store %arg13[%c0_13, %c0_14, %c0_15], %21 {strides = array<i32>} : memref<8x2x64xf32, #tpu.memory_space<vmem>>, vector<1x2x64xf32>,
    %22 = vector.extract_strided_slice %17 {offsets = [0, 0], sizes = [2, 64], strides = [1, 1]} : vector<16x64xf32> to vector<2x64xf32>
    %c0_16 = arith.constant 0 : index
    %c0_17 = arith.constant 0 : index
    %c0_18 = arith.constant 0 : index
    %23 = vector.load %arg14[%c0_16, %c0_17, %c0_18] : memref<8x2x64xf32, #tpu.memory_space<vmem>>, vector<1x2x64xf32>
    %24 = vector.shape_cast %23 : vector<1x2x64xf32> to vector<2x64xf32>
    %25 = vector.shape_cast %22 : vector<2x64xf32> to vector<1x2x64xf32>
    tpu.vector_store %arg14[%c0_16, %c0_17, %c0_18], %25 {strides = array<i32>} : memref<8x2x64xf32, #tpu.memory_space<vmem>>, vector<1x2x64xf32>,
    %26 = vector.extract_strided_slice %12 {offsets = [2, 0], sizes = [2, 64], strides = [1, 1]} : vector<16x64xf32> to vector<2x64xf32>
    %c1 = arith.constant 1 : index
    %c0_19 = arith.constant 0 : index
    %c0_20 = arith.constant 0 : index
    %27 = vector.load %arg13[%c1, %c0_19, %c0_20] : memref<8x2x64xf32, #tpu.memory_space<vmem>>, vector<1x2x64xf32>
    %28 = vector.shape_cast %27 : vector<1x2x64xf32> to vector<2x64xf32>
    %29 = vector.shape_cast %26 : vector<2x64xf32> to vector<1x2x64xf32>
    tpu.vector_store %arg13[%c1, %c0_19, %c0_20], %29 {strides = array<i32>} : memref<8x2x64xf32, #tpu.memory_space<vmem>>, vector<1x2x64xf32>,
    %30 = vector.extract_strided_slice %17 {offsets = [2, 0], sizes = [2, 64], strides = [1, 1]} : vector<16x64xf32> to vector<2x64xf32>
    %c1_21 = arith.constant 1 : index
    %c0_22 = arith.constant 0 : index
    %c0_23 = arith.constant 0 : index
    %31 = vector.load %arg14[%c1_21, %c0_22, %c0_23] : memref<8x2x64xf32, #tpu.memory_space<vmem>>, vector<1x2x64xf32>
    %32 = vector.shape_cast %31 : vector<1x2x64xf32> to vector<2x64xf32>
    %33 = vector.shape_cast %30 : vector<2x64xf32> to vector<1x2x64xf32>
    tpu.vector_store %arg14[%c1_21, %c0_22, %c0_23], %33 {strides = array<i32>} : memref<8x2x64xf32, #tpu.memory_space<vmem>>, vector<1x2x64xf32>,
    %34 = vector.extract_strided_slice %12 {offsets = [4, 0], sizes = [2, 64], strides = [1, 1]} : vector<16x64xf32> to vector<2x64xf32>
    %c2 = arith.constant 2 : index
    %c0_24 = arith.constant 0 : index
    %c0_25 = arith.constant 0 : index
    %35 = vector.load %arg13[%c2, %c0_24, %c0_25] : memref<8x2x64xf32, #tpu.memory_space<vmem>>, vector<1x2x64xf32>
    %36 = vector.shape_cast %35 : vector<1x2x64xf32> to vector<2x64xf32>
    %37 = vector.shape_cast %34 : vector<2x64xf32> to vector<1x2x64xf32>
    tpu.vector_store %arg13[%c2, %c0_24, %c0_25], %37 {strides = array<i32>} : memref<8x2x64xf32, #tpu.memory_space<vmem>>, vector<1x2x64xf32>,
    %38 = vector.extract_strided_slice %17 {offsets = [4, 0], sizes = [2, 64], strides = [1, 1]} : vector<16x64xf32> to vector<2x64xf32>
    %c2_26 = arith.constant 2 : index
    %c0_27 = arith.constant 0 : index
    %c0_28 = arith.constant 0 : index
    %39 = vector.load %arg14[%c2_26, %c0_27, %c0_28] : memref<8x2x64xf32, #tpu.memory_space<vmem>>, vector<1x2x64xf32>
    %40 = vector.shape_cast %39 : vector<1x2x64xf32> to vector<2x64xf32>
    %41 = vector.shape_cast %38 : vector<2x64xf32> to vector<1x2x64xf32>
    tpu.vector_store %arg14[%c2_26, %c0_27, %c0_28], %41 {strides = array<i32>} : memref<8x2x64xf32, #tpu.memory_space<vmem>>, vector<1x2x64xf32>,
    %42 = vector.extract_strided_slice %12 {offsets = [6, 0], sizes = [2, 64], strides = [1, 1]} : vector<16x64xf32> to vector<2x64xf32>
    %c3 = arith.constant 3 : index
    %c0_29 = arith.constant 0 : index
    %c0_30 = arith.constant 0 : index
    %43 = vector.load %arg13[%c3, %c0_29, %c0_30] : memref<8x2x64xf32, #tpu.memory_space<vmem>>, vector<1x2x64xf32>
    %44 = vector.shape_cast %43 : vector<1x2x64xf32> to vector<2x64xf32>
    %45 = vector.shape_cast %42 : vector<2x64xf32> to vector<1x2x64xf32>
    tpu.vector_store %arg13[%c3, %c0_29, %c0_30], %45 {strides = array<i32>} : memref<8x2x64xf32, #tpu.memory_space<vmem>>, vector<1x2x64xf32>,
    %46 = vector.extract_strided_slice %17 {offsets = [6, 0], sizes = [2, 64], strides = [1, 1]} : vector<16x64xf32> to vector<2x64xf32>
    %c3_31 = arith.constant 3 : index
    %c0_32 = arith.constant 0 : index
    %c0_33 = arith.constant 0 : index
    %47 = vector.load %arg14[%c3_31, %c0_32, %c0_33] : memref<8x2x64xf32, #tpu.memory_space<vmem>>, vector<1x2x64xf32>
    %48 = vector.shape_cast %47 : vector<1x2x64xf32> to vector<2x64xf32>
    %49 = vector.shape_cast %46 : vector<2x64xf32> to vector<1x2x64xf32>
    tpu.vector_store %arg14[%c3_31, %c0_32, %c0_33], %49 {strides = array<i32>} : memref<8x2x64xf32, #tpu.memory_space<vmem>>, vector<1x2x64xf32>,
    %50 = vector.extract_strided_slice %12 {offsets = [8, 0], sizes = [2, 64], strides = [1, 1]} : vector<16x64xf32> to vector<2x64xf32>
    %c4 = arith.constant 4 : index
    %c0_34 = arith.constant 0 : index
    %c0_35 = arith.constant 0 : index
    %51 = vector.load %arg13[%c4, %c0_34, %c0_35] : memref<8x2x64xf32, #tpu.memory_space<vmem>>, vector<1x2x64xf32>
    %52 = vector.shape_cast %51 : vector<1x2x64xf32> to vector<2x64xf32>
    %53 = vector.shape_cast %50 : vector<2x64xf32> to vector<1x2x64xf32>
    tpu.vector_store %arg13[%c4, %c0_34, %c0_35], %53 {strides = array<i32>} : memref<8x2x64xf32, #tpu.memory_space<vmem>>, vector<1x2x64xf32>,
    %54 = vector.extract_strided_slice %17 {offsets = [8, 0], sizes = [2, 64], strides = [1, 1]} : vector<16x64xf32> to vector<2x64xf32>
    %c4_36 = arith.constant 4 : index
    %c0_37 = arith.constant 0 : index
    %c0_38 = arith.constant 0 : index
    %55 = vector.load %arg14[%c4_36, %c0_37, %c0_38] : memref<8x2x64xf32, #tpu.memory_space<vmem>>, vector<1x2x64xf32>
    %56 = vector.shape_cast %55 : vector<1x2x64xf32> to vector<2x64xf32>
    %57 = vector.shape_cast %54 : vector<2x64xf32> to vector<1x2x64xf32>
    tpu.vector_store %arg14[%c4_36, %c0_37, %c0_38], %57 {strides = array<i32>} : memref<8x2x64xf32, #tpu.memory_space<vmem>>, vector<1x2x64xf32>,
    %58 = vector.extract_strided_slice %12 {offsets = [10, 0], sizes = [2, 64], strides = [1, 1]} : vector<16x64xf32> to vector<2x64xf32>
    %c5 = arith.constant 5 : index
    %c0_39 = arith.constant 0 : index
    %c0_40 = arith.constant 0 : index
    %59 = vector.load %arg13[%c5, %c0_39, %c0_40] : memref<8x2x64xf32, #tpu.memory_space<vmem>>, vector<1x2x64xf32>
    %60 = vector.shape_cast %59 : vector<1x2x64xf32> to vector<2x64xf32>
    %61 = vector.shape_cast %58 : vector<2x64xf32> to vector<1x2x64xf32>
    tpu.vector_store %arg13[%c5, %c0_39, %c0_40], %61 {strides = array<i32>} : memref<8x2x64xf32, #tpu.memory_space<vmem>>, vector<1x2x64xf32>,
    %62 = vector.extract_strided_slice %17 {offsets = [10, 0], sizes = [2, 64], strides = [1, 1]} : vector<16x64xf32> to vector<2x64xf32>
    %c5_41 = arith.constant 5 : index
    %c0_42 = arith.constant 0 : index
    %c0_43 = arith.constant 0 : index
    %63 = vector.load %arg14[%c5_41, %c0_42, %c0_43] : memref<8x2x64xf32, #tpu.memory_space<vmem>>, vector<1x2x64xf32>
    %64 = vector.shape_cast %63 : vector<1x2x64xf32> to vector<2x64xf32>
    %65 = vector.shape_cast %62 : vector<2x64xf32> to vector<1x2x64xf32>
    tpu.vector_store %arg14[%c5_41, %c0_42, %c0_43], %65 {strides = array<i32>} : memref<8x2x64xf32, #tpu.memory_space<vmem>>, vector<1x2x64xf32>,
    %66 = vector.extract_strided_slice %12 {offsets = [12, 0], sizes = [2, 64], strides = [1, 1]} : vector<16x64xf32> to vector<2x64xf32>
    %c6 = arith.constant 6 : index
    %c0_44 = arith.constant 0 : index
    %c0_45 = arith.constant 0 : index
    %67 = vector.load %arg13[%c6, %c0_44, %c0_45] : memref<8x2x64xf32, #tpu.memory_space<vmem>>, vector<1x2x64xf32>
    %68 = vector.shape_cast %67 : vector<1x2x64xf32> to vector<2x64xf32>
    %69 = vector.shape_cast %66 : vector<2x64xf32> to vector<1x2x64xf32>
    tpu.vector_store %arg13[%c6, %c0_44, %c0_45], %69 {strides = array<i32>} : memref<8x2x64xf32, #tpu.memory_space<vmem>>, vector<1x2x64xf32>,
    %70 = vector.extract_strided_slice %17 {offsets = [12, 0], sizes = [2, 64], strides = [1, 1]} : vector<16x64xf32> to vector<2x64xf32>
    %c6_46 = arith.constant 6 : index
    %c0_47 = arith.constant 0 : index
    %c0_48 = arith.constant 0 : index
    %71 = vector.load %arg14[%c6_46, %c0_47, %c0_48] : memref<8x2x64xf32, #tpu.memory_space<vmem>>, vector<1x2x64xf32>
    %72 = vector.shape_cast %71 : vector<1x2x64xf32> to vector<2x64xf32>
    %73 = vector.shape_cast %70 : vector<2x64xf32> to vector<1x2x64xf32>
    tpu.vector_store %arg14[%c6_46, %c0_47, %c0_48], %73 {strides = array<i32>} : memref<8x2x64xf32, #tpu.memory_space<vmem>>, vector<1x2x64xf32>,
    %74 = vector.extract_strided_slice %12 {offsets = [14, 0], sizes = [2, 64], strides = [1, 1]} : vector<16x64xf32> to vector<2x64xf32>
    %c7 = arith.constant 7 : index
    %c0_49 = arith.constant 0 : index
    %c0_50 = arith.constant 0 : index
    %75 = vector.load %arg13[%c7, %c0_49, %c0_50] : memref<8x2x64xf32, #tpu.memory_space<vmem>>, vector<1x2x64xf32>
    %76 = vector.shape_cast %75 : vector<1x2x64xf32> to vector<2x64xf32>
    %77 = vector.shape_cast %74 : vector<2x64xf32> to vector<1x2x64xf32>
    tpu.vector_store %arg13[%c7, %c0_49, %c0_50], %77 {strides = array<i32>} : memref<8x2x64xf32, #tpu.memory_space<vmem>>, vector<1x2x64xf32>,
    %78 = vector.extract_strided_slice %17 {offsets = [14, 0], sizes = [2, 64], strides = [1, 1]} : vector<16x64xf32> to vector<2x64xf32>
    %c7_51 = arith.constant 7 : index
    %c0_52 = arith.constant 0 : index
    %c0_53 = arith.constant 0 : index
    %79 = vector.load %arg14[%c7_51, %c0_52, %c0_53] : memref<8x2x64xf32, #tpu.memory_space<vmem>>, vector<1x2x64xf32>
    %80 = vector.shape_cast %79 : vector<1x2x64xf32> to vector<2x64xf32>
    %81 = vector.shape_cast %78 : vector<2x64xf32> to vector<1x2x64xf32>
    tpu.vector_store %arg14[%c7_51, %c0_52, %c0_53], %81 {strides = array<i32>} : memref<8x2x64xf32, #tpu.memory_space<vmem>>, vector<1x2x64xf32>,
    %c0_54 = arith.constant 0 : index
    %c0_55 = arith.constant 0 : index
    %82 = vector.load %arg4[%c0_54, %c0_55] : memref<16x64xf32, #tpu.memory_space<vmem>>, vector<16x64xf32>
    %c0_56 = arith.constant 0 : index
    %c0_57 = arith.constant 0 : index
    %83 = vector.load %arg7[%c0_56, %c0_57] : memref<16x64xf32, #tpu.memory_space<vmem>>, vector<16x64xf32>
    %c0_58 = arith.constant 0 : index
    %c0_59 = arith.constant 0 : index
    %84 = vector.load %arg9[%c0_58, %c0_59] : memref<16x5xf32, #tpu.memory_space<vmem>>, vector<16x5xf32>
    %c0_60 = arith.constant 0 : index
    %c0_61 = arith.constant 0 : index
    %85 = vector.load %arg10[%c0_60, %c0_61] : memref<16x5xf32, #tpu.memory_space<vmem>>, vector<16x5xf32>
    %c0_62 = arith.constant 0 : index
    %c0_63 = arith.constant 0 : index
    %86 = vector.load %arg11[%c0_62, %c0_63] : memref<1x5xf32, #tpu.memory_space<vmem>>, vector<1x5xf32>
    %87 = vector.shape_cast %86 : vector<1x5xf32> to vector<1x1x5xf32>
    %88 = vector.broadcast %87 : vector<1x1x5xf32> to vector<8x2x5xf32>
    %c0_64 = arith.constant 0 : index
    %c0_65 = arith.constant 0 : index
    %c0_66 = arith.constant 0 : index
    %89 = vector.load %arg12[%c0_64, %c0_65, %c0_66] : memref<8x2x5xf32, #tpu.memory_space<vmem>>, vector<8x2x5xf32>
    tpu.vector_store %arg12[%c0_64, %c0_65, %c0_66], %88 {strides = array<i32>} : memref<8x2x5xf32, #tpu.memory_space<vmem>>, vector<8x2x5xf32>,
    %cst_67 = arith.constant 0.000000e+00 : f32
    %90 = vector.broadcast %cst_67 : f32 to vector<2x16xf32>
    %c0_i32 = arith.constant 0 : i32
    %c7_i32 = arith.constant 7 : i32
    %91 = arith.subi %c7_i32, %c0_i32 : i32
    %92 = arith.index_cast %c0_i32 : i32 to index
    %c0_68 = arith.constant 0 : index
    %c0_69 = arith.constant 0 : index
    %93 = vector.load %arg13[%92, %c0_68, %c0_69] : memref<8x2x64xf32, #tpu.memory_space<vmem>>, vector<1x2x64xf32>
    %94 = vector.shape_cast %93 : vector<1x2x64xf32> to vector<2x64xf32>
    %cst_70 = arith.constant dense<0.000000e+00> : vector<2x64xf32>
    %95 = tpu.matmul %90, %82, %cst_70 {dimension_numbers = #tpu.dot_dimension_numbers<[1], [0], [0], [1], [0, 0, 1, 1], [], []>} : vector<2x16xf32>, vector<16x64xf32>, vector<2x64xf32> -> vector<2x64xf32>
    %96 = arith.addf %94, %95 : vector<2x64xf32>
    %97 = vector.extract_strided_slice %96 {offsets = [0, 0], sizes = [2, 16], strides = [1, 1]} : vector<2x64xf32> to vector<2x16xf32>
    %98 = arith.negf %97 : vector<2x16xf32>
    %99 = math.exp %98 : vector<2x16xf32>
    %cst_71 = arith.constant 1.000000e+00 : f32
    %100 = vector.broadcast %cst_71 : f32 to vector<2x16xf32>
    %101 = arith.addf %100, %99 : vector<2x16xf32>
    %102 = arith.divf %100, %101 : vector<2x16xf32>
    %103 = vector.extract_strided_slice %96 {offsets = [0, 16], sizes = [2, 16], strides = [1, 1]} : vector<2x64xf32> to vector<2x16xf32>
    %104 = arith.negf %103 : vector<2x16xf32>
    %105 = math.exp %104 : vector<2x16xf32>
    %cst_72 = arith.constant 1.000000e+00 : f32
    %106 = vector.broadcast %cst_72 : f32 to vector<2x16xf32>
    %107 = arith.addf %106, %105 : vector<2x16xf32>
    %108 = arith.divf %106, %107 : vector<2x16xf32>
    %109 = vector.extract_strided_slice %96 {offsets = [0, 32], sizes = [2, 16], strides = [1, 1]} : vector<2x64xf32> to vector<2x16xf32>
    %110 = math.tanh %109 : vector<2x16xf32>
    %111 = vector.extract_strided_slice %96 {offsets = [0, 48], sizes = [2, 16], strides = [1, 1]} : vector<2x64xf32> to vector<2x16xf32>
    %112 = arith.negf %111 : vector<2x16xf32>
    %113 = math.exp %112 : vector<2x16xf32>
    %cst_73 = arith.constant 1.000000e+00 : f32
    %114 = vector.broadcast %cst_73 : f32 to vector<2x16xf32>
    %115 = arith.addf %114, %113 : vector<2x16xf32>
    %116 = arith.divf %114, %115 : vector<2x16xf32>
    %117 = arith.mulf %108, %90 : vector<2x16xf32>
    %118 = arith.mulf %102, %110 : vector<2x16xf32>
    %119 = arith.addf %117, %118 : vector<2x16xf32>
    %120 = math.tanh %119 : vector<2x16xf32>
    %121 = arith.mulf %116, %120 : vector<2x16xf32>
    %122 = arith.index_cast %91 : i32 to index
    %c0_74 = arith.constant 0 : index
    %c0_75 = arith.constant 0 : index
    %123 = vector.load %arg14[%122, %c0_74, %c0_75] : memref<8x2x64xf32, #tpu.memory_space<vmem>>, vector<1x2x64xf32>
    %124 = vector.shape_cast %123 : vector<1x2x64xf32> to vector<2x64xf32>
    %cst_76 = arith.constant dense<0.000000e+00> : vector<2x64xf32>
    %125 = tpu.matmul %90, %83, %cst_76 {dimension_numbers = #tpu.dot_dimension_numbers<[1], [0], [0], [1], [0, 0, 1, 1], [], []>} : vector<2x16xf32>, vector<16x64xf32>, vector<2x64xf32> -> vector<2x64xf32>
    %126 = arith.addf %124, %125 : vector<2x64xf32>
    %127 = vector.extract_strided_slice %126 {offsets = [0, 0], sizes = [2, 16], strides = [1, 1]} : vector<2x64xf32> to vector<2x16xf32>
    %128 = arith.negf %127 : vector<2x16xf32>
    %129 = math.exp %128 : vector<2x16xf32>
    %cst_77 = arith.constant 1.000000e+00 : f32
    %130 = vector.broadcast %cst_77 : f32 to vector<2x16xf32>
    %131 = arith.addf %130, %129 : vector<2x16xf32>
    %132 = arith.divf %130, %131 : vector<2x16xf32>
    %133 = vector.extract_strided_slice %126 {offsets = [0, 16], sizes = [2, 16], strides = [1, 1]} : vector<2x64xf32> to vector<2x16xf32>
    %134 = arith.negf %133 : vector<2x16xf32>
    %135 = math.exp %134 : vector<2x16xf32>
    %cst_78 = arith.constant 1.000000e+00 : f32
    %136 = vector.broadcast %cst_78 : f32 to vector<2x16xf32>
    %137 = arith.addf %136, %135 : vector<2x16xf32>
    %138 = arith.divf %136, %137 : vector<2x16xf32>
    %139 = vector.extract_strided_slice %126 {offsets = [0, 32], sizes = [2, 16], strides = [1, 1]} : vector<2x64xf32> to vector<2x16xf32>
    %140 = math.tanh %139 : vector<2x16xf32>
    %141 = vector.extract_strided_slice %126 {offsets = [0, 48], sizes = [2, 16], strides = [1, 1]} : vector<2x64xf32> to vector<2x16xf32>
    %142 = arith.negf %141 : vector<2x16xf32>
    %143 = math.exp %142 : vector<2x16xf32>
    %cst_79 = arith.constant 1.000000e+00 : f32
    %144 = vector.broadcast %cst_79 : f32 to vector<2x16xf32>
    %145 = arith.addf %144, %143 : vector<2x16xf32>
    %146 = arith.divf %144, %145 : vector<2x16xf32>
    %147 = arith.mulf %138, %90 : vector<2x16xf32>
    %148 = arith.mulf %132, %140 : vector<2x16xf32>
    %149 = arith.addf %147, %148 : vector<2x16xf32>
    %150 = math.tanh %149 : vector<2x16xf32>
    %151 = arith.mulf %146, %150 : vector<2x16xf32>
    %152 = arith.index_cast %c0_i32 : i32 to index
    %c0_80 = arith.constant 0 : index
    %c0_81 = arith.constant 0 : index
    %153 = vector.load %arg12[%152, %c0_80, %c0_81] : memref<8x2x5xf32, #tpu.memory_space<vmem>>, vector<1x2x5xf32>
    %154 = vector.shape_cast %153 : vector<1x2x5xf32> to vector<2x5xf32>
    %cst_82 = arith.constant dense<0.000000e+00> : vector<2x5xf32>
    %155 = tpu.matmul %121, %84, %cst_82 {dimension_numbers = #tpu.dot_dimension_numbers<[1], [0], [0], [1], [0, 0, 1, 1], [], []>} : vector<2x16xf32>, vector<16x5xf32>, vector<2x5xf32> -> vector<2x5xf32>
    %156 = arith.addf %154, %155 : vector<2x5xf32>
    %157 = arith.index_cast %c0_i32 : i32 to index
    %c0_83 = arith.constant 0 : index
    %c0_84 = arith.constant 0 : index
    %158 = vector.load %arg12[%157, %c0_83, %c0_84] : memref<8x2x5xf32, #tpu.memory_space<vmem>>, vector<1x2x5xf32>
    %159 = vector.shape_cast %158 : vector<1x2x5xf32> to vector<2x5xf32>
    %160 = vector.shape_cast %156 : vector<2x5xf32> to vector<1x2x5xf32>
    tpu.vector_store %arg12[%157, %c0_83, %c0_84], %160 {strides = array<i32>} : memref<8x2x5xf32, #tpu.memory_space<vmem>>, vector<1x2x5xf32>,
    %161 = arith.index_cast %91 : i32 to index
    %c0_85 = arith.constant 0 : index
    %c0_86 = arith.constant 0 : index
    %162 = vector.load %arg12[%161, %c0_85, %c0_86] : memref<8x2x5xf32, #tpu.memory_space<vmem>>, vector<1x2x5xf32>
    %163 = vector.shape_cast %162 : vector<1x2x5xf32> to vector<2x5xf32>
    %cst_87 = arith.constant dense<0.000000e+00> : vector<2x5xf32>
    %164 = tpu.matmul %151, %85, %cst_87 {dimension_numbers = #tpu.dot_dimension_numbers<[1], [0], [0], [1], [0, 0, 1, 1], [], []>} : vector<2x16xf32>, vector<16x5xf32>, vector<2x5xf32> -> vector<2x5xf32>
    %165 = arith.addf %163, %164 : vector<2x5xf32>
    %166 = arith.index_cast %91 : i32 to index
    %c0_88 = arith.constant 0 : index
    %c0_89 = arith.constant 0 : index
    %167 = vector.load %arg12[%166, %c0_88, %c0_89] : memref<8x2x5xf32, #tpu.memory_space<vmem>>, vector<1x2x5xf32>
    %168 = vector.shape_cast %167 : vector<1x2x5xf32> to vector<2x5xf32>
    %169 = vector.shape_cast %165 : vector<2x5xf32> to vector<1x2x5xf32>
    tpu.vector_store %arg12[%166, %c0_88, %c0_89], %169 {strides = array<i32>} : memref<8x2x5xf32, #tpu.memory_space<vmem>>, vector<1x2x5xf32>,
    %c1_i32 = arith.constant 1 : i32
    %c7_i32_90 = arith.constant 7 : i32
    %170 = arith.subi %c7_i32_90, %c1_i32 : i32
    %171 = arith.index_cast %c1_i32 : i32 to index
    %c0_91 = arith.constant 0 : index
    %c0_92 = arith.constant 0 : index
    %172 = vector.load %arg13[%171, %c0_91, %c0_92] : memref<8x2x64xf32, #tpu.memory_space<vmem>>, vector<1x2x64xf32>
    %173 = vector.shape_cast %172 : vector<1x2x64xf32> to vector<2x64xf32>
    %cst_93 = arith.constant dense<0.000000e+00> : vector<2x64xf32>
    %174 = tpu.matmul %121, %82, %cst_93 {dimension_numbers = #tpu.dot_dimension_numbers<[1], [0], [0], [1], [0, 0, 1, 1], [], []>} : vector<2x16xf32>, vector<16x64xf32>, vector<2x64xf32> -> vector<2x64xf32>
    %175 = arith.addf %173, %174 : vector<2x64xf32>
    %176 = vector.extract_strided_slice %175 {offsets = [0, 0], sizes = [2, 16], strides = [1, 1]} : vector<2x64xf32> to vector<2x16xf32>
    %177 = arith.negf %176 : vector<2x16xf32>
    %178 = math.exp %177 : vector<2x16xf32>
    %cst_94 = arith.constant 1.000000e+00 : f32
    %179 = vector.broadcast %cst_94 : f32 to vector<2x16xf32>
    %180 = arith.addf %179, %178 : vector<2x16xf32>
    %181 = arith.divf %179, %180 : vector<2x16xf32>
    %182 = vector.extract_strided_slice %175 {offsets = [0, 16], sizes = [2, 16], strides = [1, 1]} : vector<2x64xf32> to vector<2x16xf32>
    %183 = arith.negf %182 : vector<2x16xf32>
    %184 = math.exp %183 : vector<2x16xf32>
    %cst_95 = arith.constant 1.000000e+00 : f32
    %185 = vector.broadcast %cst_95 : f32 to vector<2x16xf32>
    %186 = arith.addf %185, %184 : vector<2x16xf32>
    %187 = arith.divf %185, %186 : vector<2x16xf32>
    %188 = vector.extract_strided_slice %175 {offsets = [0, 32], sizes = [2, 16], strides = [1, 1]} : vector<2x64xf32> to vector<2x16xf32>
    %189 = math.tanh %188 : vector<2x16xf32>
    %190 = vector.extract_strided_slice %175 {offsets = [0, 48], sizes = [2, 16], strides = [1, 1]} : vector<2x64xf32> to vector<2x16xf32>
    %191 = arith.negf %190 : vector<2x16xf32>
    %192 = math.exp %191 : vector<2x16xf32>
    %cst_96 = arith.constant 1.000000e+00 : f32
    %193 = vector.broadcast %cst_96 : f32 to vector<2x16xf32>
    %194 = arith.addf %193, %192 : vector<2x16xf32>
    %195 = arith.divf %193, %194 : vector<2x16xf32>
    %196 = arith.mulf %187, %119 : vector<2x16xf32>
    %197 = arith.mulf %181, %189 : vector<2x16xf32>
    %198 = arith.addf %196, %197 : vector<2x16xf32>
    %199 = math.tanh %198 : vector<2x16xf32>
    %200 = arith.mulf %195, %199 : vector<2x16xf32>
    %201 = arith.index_cast %170 : i32 to index
    %c0_97 = arith.constant 0 : index
    %c0_98 = arith.constant 0 : index
    %202 = vector.load %arg14[%201, %c0_97, %c0_98] : memref<8x2x64xf32, #tpu.memory_space<vmem>>, vector<1x2x64xf32>
    %203 = vector.shape_cast %202 : vector<1x2x64xf32> to vector<2x64xf32>
    %cst_99 = arith.constant dense<0.000000e+00> : vector<2x64xf32>
    %204 = tpu.matmul %151, %83, %cst_99 {dimension_numbers = #tpu.dot_dimension_numbers<[1], [0], [0], [1], [0, 0, 1, 1], [], []>} : vector<2x16xf32>, vector<16x64xf32>, vector<2x64xf32> -> vector<2x64xf32>
    %205 = arith.addf %203, %204 : vector<2x64xf32>
    %206 = vector.extract_strided_slice %205 {offsets = [0, 0], sizes = [2, 16], strides = [1, 1]} : vector<2x64xf32> to vector<2x16xf32>
    %207 = arith.negf %206 : vector<2x16xf32>
    %208 = math.exp %207 : vector<2x16xf32>
    %cst_100 = arith.constant 1.000000e+00 : f32
    %209 = vector.broadcast %cst_100 : f32 to vector<2x16xf32>
    %210 = arith.addf %209, %208 : vector<2x16xf32>
    %211 = arith.divf %209, %210 : vector<2x16xf32>
    %212 = vector.extract_strided_slice %205 {offsets = [0, 16], sizes = [2, 16], strides = [1, 1]} : vector<2x64xf32> to vector<2x16xf32>
    %213 = arith.negf %212 : vector<2x16xf32>
    %214 = math.exp %213 : vector<2x16xf32>
    %cst_101 = arith.constant 1.000000e+00 : f32
    %215 = vector.broadcast %cst_101 : f32 to vector<2x16xf32>
    %216 = arith.addf %215, %214 : vector<2x16xf32>
    %217 = arith.divf %215, %216 : vector<2x16xf32>
    %218 = vector.extract_strided_slice %205 {offsets = [0, 32], sizes = [2, 16], strides = [1, 1]} : vector<2x64xf32> to vector<2x16xf32>
    %219 = math.tanh %218 : vector<2x16xf32>
    %220 = vector.extract_strided_slice %205 {offsets = [0, 48], sizes = [2, 16], strides = [1, 1]} : vector<2x64xf32> to vector<2x16xf32>
    %221 = arith.negf %220 : vector<2x16xf32>
    %222 = math.exp %221 : vector<2x16xf32>
    %cst_102 = arith.constant 1.000000e+00 : f32
    %223 = vector.broadcast %cst_102 : f32 to vector<2x16xf32>
    %224 = arith.addf %223, %222 : vector<2x16xf32>
    %225 = arith.divf %223, %224 : vector<2x16xf32>
    %226 = arith.mulf %217, %149 : vector<2x16xf32>
    %227 = arith.mulf %211, %219 : vector<2x16xf32>
    %228 = arith.addf %226, %227 : vector<2x16xf32>
    %229 = math.tanh %228 : vector<2x16xf32>
    %230 = arith.mulf %225, %229 : vector<2x16xf32>
    %231 = arith.index_cast %c1_i32 : i32 to index
    %c0_103 = arith.constant 0 : index
    %c0_104 = arith.constant 0 : index
    %232 = vector.load %arg12[%231, %c0_103, %c0_104] : memref<8x2x5xf32, #tpu.memory_space<vmem>>, vector<1x2x5xf32>
    %233 = vector.shape_cast %232 : vector<1x2x5xf32> to vector<2x5xf32>
    %cst_105 = arith.constant dense<0.000000e+00> : vector<2x5xf32>
    %234 = tpu.matmul %200, %84, %cst_105 {dimension_numbers = #tpu.dot_dimension_numbers<[1], [0], [0], [1], [0, 0, 1, 1], [], []>} : vector<2x16xf32>, vector<16x5xf32>, vector<2x5xf32> -> vector<2x5xf32>
    %235 = arith.addf %233, %234 : vector<2x5xf32>
    %236 = arith.index_cast %c1_i32 : i32 to index
    %c0_106 = arith.constant 0 : index
    %c0_107 = arith.constant 0 : index
    %237 = vector.load %arg12[%236, %c0_106, %c0_107] : memref<8x2x5xf32, #tpu.memory_space<vmem>>, vector<1x2x5xf32>
    %238 = vector.shape_cast %237 : vector<1x2x5xf32> to vector<2x5xf32>
    %239 = vector.shape_cast %235 : vector<2x5xf32> to vector<1x2x5xf32>
    tpu.vector_store %arg12[%236, %c0_106, %c0_107], %239 {strides = array<i32>} : memref<8x2x5xf32, #tpu.memory_space<vmem>>, vector<1x2x5xf32>,
    %240 = arith.index_cast %170 : i32 to index
    %c0_108 = arith.constant 0 : index
    %c0_109 = arith.constant 0 : index
    %241 = vector.load %arg12[%240, %c0_108, %c0_109] : memref<8x2x5xf32, #tpu.memory_space<vmem>>, vector<1x2x5xf32>
    %242 = vector.shape_cast %241 : vector<1x2x5xf32> to vector<2x5xf32>
    %cst_110 = arith.constant dense<0.000000e+00> : vector<2x5xf32>
    %243 = tpu.matmul %230, %85, %cst_110 {dimension_numbers = #tpu.dot_dimension_numbers<[1], [0], [0], [1], [0, 0, 1, 1], [], []>} : vector<2x16xf32>, vector<16x5xf32>, vector<2x5xf32> -> vector<2x5xf32>
    %244 = arith.addf %242, %243 : vector<2x5xf32>
    %245 = arith.index_cast %170 : i32 to index
    %c0_111 = arith.constant 0 : index
    %c0_112 = arith.constant 0 : index
    %246 = vector.load %arg12[%245, %c0_111, %c0_112] : memref<8x2x5xf32, #tpu.memory_space<vmem>>, vector<1x2x5xf32>
    %247 = vector.shape_cast %246 : vector<1x2x5xf32> to vector<2x5xf32>
    %248 = vector.shape_cast %244 : vector<2x5xf32> to vector<1x2x5xf32>
    tpu.vector_store %arg12[%245, %c0_111, %c0_112], %248 {strides = array<i32>} : memref<8x2x5xf32, #tpu.memory_space<vmem>>, vector<1x2x5xf32>,
    %c2_i32 = arith.constant 2 : i32
    %c7_i32_113 = arith.constant 7 : i32
    %249 = arith.subi %c7_i32_113, %c2_i32 : i32
    %250 = arith.index_cast %c2_i32 : i32 to index
    %c0_114 = arith.constant 0 : index
    %c0_115 = arith.constant 0 : index
    %251 = vector.load %arg13[%250, %c0_114, %c0_115] : memref<8x2x64xf32, #tpu.memory_space<vmem>>, vector<1x2x64xf32>
    %252 = vector.shape_cast %251 : vector<1x2x64xf32> to vector<2x64xf32>
    %cst_116 = arith.constant dense<0.000000e+00> : vector<2x64xf32>
    %253 = tpu.matmul %200, %82, %cst_116 {dimension_numbers = #tpu.dot_dimension_numbers<[1], [0], [0], [1], [0, 0, 1, 1], [], []>} : vector<2x16xf32>, vector<16x64xf32>, vector<2x64xf32> -> vector<2x64xf32>
    %254 = arith.addf %252, %253 : vector<2x64xf32>
    %255 = vector.extract_strided_slice %254 {offsets = [0, 0], sizes = [2, 16], strides = [1, 1]} : vector<2x64xf32> to vector<2x16xf32>
    %256 = arith.negf %255 : vector<2x16xf32>
    %257 = math.exp %256 : vector<2x16xf32>
    %cst_117 = arith.constant 1.000000e+00 : f32
    %258 = vector.broadcast %cst_117 : f32 to vector<2x16xf32>
    %259 = arith.addf %258, %257 : vector<2x16xf32>
    %260 = arith.divf %258, %259 : vector<2x16xf32>
    %261 = vector.extract_strided_slice %254 {offsets = [0, 16], sizes = [2, 16], strides = [1, 1]} : vector<2x64xf32> to vector<2x16xf32>
    %262 = arith.negf %261 : vector<2x16xf32>
    %263 = math.exp %262 : vector<2x16xf32>
    %cst_118 = arith.constant 1.000000e+00 : f32
    %264 = vector.broadcast %cst_118 : f32 to vector<2x16xf32>
    %265 = arith.addf %264, %263 : vector<2x16xf32>
    %266 = arith.divf %264, %265 : vector<2x16xf32>
    %267 = vector.extract_strided_slice %254 {offsets = [0, 32], sizes = [2, 16], strides = [1, 1]} : vector<2x64xf32> to vector<2x16xf32>
    %268 = math.tanh %267 : vector<2x16xf32>
    %269 = vector.extract_strided_slice %254 {offsets = [0, 48], sizes = [2, 16], strides = [1, 1]} : vector<2x64xf32> to vector<2x16xf32>
    %270 = arith.negf %269 : vector<2x16xf32>
    %271 = math.exp %270 : vector<2x16xf32>
    %cst_119 = arith.constant 1.000000e+00 : f32
    %272 = vector.broadcast %cst_119 : f32 to vector<2x16xf32>
    %273 = arith.addf %272, %271 : vector<2x16xf32>
    %274 = arith.divf %272, %273 : vector<2x16xf32>
    %275 = arith.mulf %266, %198 : vector<2x16xf32>
    %276 = arith.mulf %260, %268 : vector<2x16xf32>
    %277 = arith.addf %275, %276 : vector<2x16xf32>
    %278 = math.tanh %277 : vector<2x16xf32>
    %279 = arith.mulf %274, %278 : vector<2x16xf32>
    %280 = arith.index_cast %249 : i32 to index
    %c0_120 = arith.constant 0 : index
    %c0_121 = arith.constant 0 : index
    %281 = vector.load %arg14[%280, %c0_120, %c0_121] : memref<8x2x64xf32, #tpu.memory_space<vmem>>, vector<1x2x64xf32>
    %282 = vector.shape_cast %281 : vector<1x2x64xf32> to vector<2x64xf32>
    %cst_122 = arith.constant dense<0.000000e+00> : vector<2x64xf32>
    %283 = tpu.matmul %230, %83, %cst_122 {dimension_numbers = #tpu.dot_dimension_numbers<[1], [0], [0], [1], [0, 0, 1, 1], [], []>} : vector<2x16xf32>, vector<16x64xf32>, vector<2x64xf32> -> vector<2x64xf32>
    %284 = arith.addf %282, %283 : vector<2x64xf32>
    %285 = vector.extract_strided_slice %284 {offsets = [0, 0], sizes = [2, 16], strides = [1, 1]} : vector<2x64xf32> to vector<2x16xf32>
    %286 = arith.negf %285 : vector<2x16xf32>
    %287 = math.exp %286 : vector<2x16xf32>
    %cst_123 = arith.constant 1.000000e+00 : f32
    %288 = vector.broadcast %cst_123 : f32 to vector<2x16xf32>
    %289 = arith.addf %288, %287 : vector<2x16xf32>
    %290 = arith.divf %288, %289 : vector<2x16xf32>
    %291 = vector.extract_strided_slice %284 {offsets = [0, 16], sizes = [2, 16], strides = [1, 1]} : vector<2x64xf32> to vector<2x16xf32>
    %292 = arith.negf %291 : vector<2x16xf32>
    %293 = math.exp %292 : vector<2x16xf32>
    %cst_124 = arith.constant 1.000000e+00 : f32
    %294 = vector.broadcast %cst_124 : f32 to vector<2x16xf32>
    %295 = arith.addf %294, %293 : vector<2x16xf32>
    %296 = arith.divf %294, %295 : vector<2x16xf32>
    %297 = vector.extract_strided_slice %284 {offsets = [0, 32], sizes = [2, 16], strides = [1, 1]} : vector<2x64xf32> to vector<2x16xf32>
    %298 = math.tanh %297 : vector<2x16xf32>
    %299 = vector.extract_strided_slice %284 {offsets = [0, 48], sizes = [2, 16], strides = [1, 1]} : vector<2x64xf32> to vector<2x16xf32>
    %300 = arith.negf %299 : vector<2x16xf32>
    %301 = math.exp %300 : vector<2x16xf32>
    %cst_125 = arith.constant 1.000000e+00 : f32
    %302 = vector.broadcast %cst_125 : f32 to vector<2x16xf32>
    %303 = arith.addf %302, %301 : vector<2x16xf32>
    %304 = arith.divf %302, %303 : vector<2x16xf32>
    %305 = arith.mulf %296, %228 : vector<2x16xf32>
    %306 = arith.mulf %290, %298 : vector<2x16xf32>
    %307 = arith.addf %305, %306 : vector<2x16xf32>
    %308 = math.tanh %307 : vector<2x16xf32>
    %309 = arith.mulf %304, %308 : vector<2x16xf32>
    %310 = arith.index_cast %c2_i32 : i32 to index
    %c0_126 = arith.constant 0 : index
    %c0_127 = arith.constant 0 : index
    %311 = vector.load %arg12[%310, %c0_126, %c0_127] : memref<8x2x5xf32, #tpu.memory_space<vmem>>, vector<1x2x5xf32>
    %312 = vector.shape_cast %311 : vector<1x2x5xf32> to vector<2x5xf32>
    %cst_128 = arith.constant dense<0.000000e+00> : vector<2x5xf32>
    %313 = tpu.matmul %279, %84, %cst_128 {dimension_numbers = #tpu.dot_dimension_numbers<[1], [0], [0], [1], [0, 0, 1, 1], [], []>} : vector<2x16xf32>, vector<16x5xf32>, vector<2x5xf32> -> vector<2x5xf32>
    %314 = arith.addf %312, %313 : vector<2x5xf32>
    %315 = arith.index_cast %c2_i32 : i32 to index
    %c0_129 = arith.constant 0 : index
    %c0_130 = arith.constant 0 : index
    %316 = vector.load %arg12[%315, %c0_129, %c0_130] : memref<8x2x5xf32, #tpu.memory_space<vmem>>, vector<1x2x5xf32>
    %317 = vector.shape_cast %316 : vector<1x2x5xf32> to vector<2x5xf32>
    %318 = vector.shape_cast %314 : vector<2x5xf32> to vector<1x2x5xf32>
    tpu.vector_store %arg12[%315, %c0_129, %c0_130], %318 {strides = array<i32>} : memref<8x2x5xf32, #tpu.memory_space<vmem>>, vector<1x2x5xf32>,
    %319 = arith.index_cast %249 : i32 to index
    %c0_131 = arith.constant 0 : index
    %c0_132 = arith.constant 0 : index
    %320 = vector.load %arg12[%319, %c0_131, %c0_132] : memref<8x2x5xf32, #tpu.memory_space<vmem>>, vector<1x2x5xf32>
    %321 = vector.shape_cast %320 : vector<1x2x5xf32> to vector<2x5xf32>
    %cst_133 = arith.constant dense<0.000000e+00> : vector<2x5xf32>
    %322 = tpu.matmul %309, %85, %cst_133 {dimension_numbers = #tpu.dot_dimension_numbers<[1], [0], [0], [1], [0, 0, 1, 1], [], []>} : vector<2x16xf32>, vector<16x5xf32>, vector<2x5xf32> -> vector<2x5xf32>
    %323 = arith.addf %321, %322 : vector<2x5xf32>
    %324 = arith.index_cast %249 : i32 to index
    %c0_134 = arith.constant 0 : index
    %c0_135 = arith.constant 0 : index
    %325 = vector.load %arg12[%324, %c0_134, %c0_135] : memref<8x2x5xf32, #tpu.memory_space<vmem>>, vector<1x2x5xf32>
    %326 = vector.shape_cast %325 : vector<1x2x5xf32> to vector<2x5xf32>
    %327 = vector.shape_cast %323 : vector<2x5xf32> to vector<1x2x5xf32>
    tpu.vector_store %arg12[%324, %c0_134, %c0_135], %327 {strides = array<i32>} : memref<8x2x5xf32, #tpu.memory_space<vmem>>, vector<1x2x5xf32>,
    %c3_i32 = arith.constant 3 : i32
    %c7_i32_136 = arith.constant 7 : i32
    %328 = arith.subi %c7_i32_136, %c3_i32 : i32
    %329 = arith.index_cast %c3_i32 : i32 to index
    %c0_137 = arith.constant 0 : index
    %c0_138 = arith.constant 0 : index
    %330 = vector.load %arg13[%329, %c0_137, %c0_138] : memref<8x2x64xf32, #tpu.memory_space<vmem>>, vector<1x2x64xf32>
    %331 = vector.shape_cast %330 : vector<1x2x64xf32> to vector<2x64xf32>
    %cst_139 = arith.constant dense<0.000000e+00> : vector<2x64xf32>
    %332 = tpu.matmul %279, %82, %cst_139 {dimension_numbers = #tpu.dot_dimension_numbers<[1], [0], [0], [1], [0, 0, 1, 1], [], []>} : vector<2x16xf32>, vector<16x64xf32>, vector<2x64xf32> -> vector<2x64xf32>
    %333 = arith.addf %331, %332 : vector<2x64xf32>
    %334 = vector.extract_strided_slice %333 {offsets = [0, 0], sizes = [2, 16], strides = [1, 1]} : vector<2x64xf32> to vector<2x16xf32>
    %335 = arith.negf %334 : vector<2x16xf32>
    %336 = math.exp %335 : vector<2x16xf32>
    %cst_140 = arith.constant 1.000000e+00 : f32
    %337 = vector.broadcast %cst_140 : f32 to vector<2x16xf32>
    %338 = arith.addf %337, %336 : vector<2x16xf32>
    %339 = arith.divf %337, %338 : vector<2x16xf32>
    %340 = vector.extract_strided_slice %333 {offsets = [0, 16], sizes = [2, 16], strides = [1, 1]} : vector<2x64xf32> to vector<2x16xf32>
    %341 = arith.negf %340 : vector<2x16xf32>
    %342 = math.exp %341 : vector<2x16xf32>
    %cst_141 = arith.constant 1.000000e+00 : f32
    %343 = vector.broadcast %cst_141 : f32 to vector<2x16xf32>
    %344 = arith.addf %343, %342 : vector<2x16xf32>
    %345 = arith.divf %343, %344 : vector<2x16xf32>
    %346 = vector.extract_strided_slice %333 {offsets = [0, 32], sizes = [2, 16], strides = [1, 1]} : vector<2x64xf32> to vector<2x16xf32>
    %347 = math.tanh %346 : vector<2x16xf32>
    %348 = vector.extract_strided_slice %333 {offsets = [0, 48], sizes = [2, 16], strides = [1, 1]} : vector<2x64xf32> to vector<2x16xf32>
    %349 = arith.negf %348 : vector<2x16xf32>
    %350 = math.exp %349 : vector<2x16xf32>
    %cst_142 = arith.constant 1.000000e+00 : f32
    %351 = vector.broadcast %cst_142 : f32 to vector<2x16xf32>
    %352 = arith.addf %351, %350 : vector<2x16xf32>
    %353 = arith.divf %351, %352 : vector<2x16xf32>
    %354 = arith.mulf %345, %277 : vector<2x16xf32>
    %355 = arith.mulf %339, %347 : vector<2x16xf32>
    %356 = arith.addf %354, %355 : vector<2x16xf32>
    %357 = math.tanh %356 : vector<2x16xf32>
    %358 = arith.mulf %353, %357 : vector<2x16xf32>
    %359 = arith.index_cast %328 : i32 to index
    %c0_143 = arith.constant 0 : index
    %c0_144 = arith.constant 0 : index
    %360 = vector.load %arg14[%359, %c0_143, %c0_144] : memref<8x2x64xf32, #tpu.memory_space<vmem>>, vector<1x2x64xf32>
    %361 = vector.shape_cast %360 : vector<1x2x64xf32> to vector<2x64xf32>
    %cst_145 = arith.constant dense<0.000000e+00> : vector<2x64xf32>
    %362 = tpu.matmul %309, %83, %cst_145 {dimension_numbers = #tpu.dot_dimension_numbers<[1], [0], [0], [1], [0, 0, 1, 1], [], []>} : vector<2x16xf32>, vector<16x64xf32>, vector<2x64xf32> -> vector<2x64xf32>
    %363 = arith.addf %361, %362 : vector<2x64xf32>
    %364 = vector.extract_strided_slice %363 {offsets = [0, 0], sizes = [2, 16], strides = [1, 1]} : vector<2x64xf32> to vector<2x16xf32>
    %365 = arith.negf %364 : vector<2x16xf32>
    %366 = math.exp %365 : vector<2x16xf32>
    %cst_146 = arith.constant 1.000000e+00 : f32
    %367 = vector.broadcast %cst_146 : f32 to vector<2x16xf32>
    %368 = arith.addf %367, %366 : vector<2x16xf32>
    %369 = arith.divf %367, %368 : vector<2x16xf32>
    %370 = vector.extract_strided_slice %363 {offsets = [0, 16], sizes = [2, 16], strides = [1, 1]} : vector<2x64xf32> to vector<2x16xf32>
    %371 = arith.negf %370 : vector<2x16xf32>
    %372 = math.exp %371 : vector<2x16xf32>
    %cst_147 = arith.constant 1.000000e+00 : f32
    %373 = vector.broadcast %cst_147 : f32 to vector<2x16xf32>
    %374 = arith.addf %373, %372 : vector<2x16xf32>
    %375 = arith.divf %373, %374 : vector<2x16xf32>
    %376 = vector.extract_strided_slice %363 {offsets = [0, 32], sizes = [2, 16], strides = [1, 1]} : vector<2x64xf32> to vector<2x16xf32>
    %377 = math.tanh %376 : vector<2x16xf32>
    %378 = vector.extract_strided_slice %363 {offsets = [0, 48], sizes = [2, 16], strides = [1, 1]} : vector<2x64xf32> to vector<2x16xf32>
    %379 = arith.negf %378 : vector<2x16xf32>
    %380 = math.exp %379 : vector<2x16xf32>
    %cst_148 = arith.constant 1.000000e+00 : f32
    %381 = vector.broadcast %cst_148 : f32 to vector<2x16xf32>
    %382 = arith.addf %381, %380 : vector<2x16xf32>
    %383 = arith.divf %381, %382 : vector<2x16xf32>
    %384 = arith.mulf %375, %307 : vector<2x16xf32>
    %385 = arith.mulf %369, %377 : vector<2x16xf32>
    %386 = arith.addf %384, %385 : vector<2x16xf32>
    %387 = math.tanh %386 : vector<2x16xf32>
    %388 = arith.mulf %383, %387 : vector<2x16xf32>
    %389 = arith.index_cast %c3_i32 : i32 to index
    %c0_149 = arith.constant 0 : index
    %c0_150 = arith.constant 0 : index
    %390 = vector.load %arg12[%389, %c0_149, %c0_150] : memref<8x2x5xf32, #tpu.memory_space<vmem>>, vector<1x2x5xf32>
    %391 = vector.shape_cast %390 : vector<1x2x5xf32> to vector<2x5xf32>
    %cst_151 = arith.constant dense<0.000000e+00> : vector<2x5xf32>
    %392 = tpu.matmul %358, %84, %cst_151 {dimension_numbers = #tpu.dot_dimension_numbers<[1], [0], [0], [1], [0, 0, 1, 1], [], []>} : vector<2x16xf32>, vector<16x5xf32>, vector<2x5xf32> -> vector<2x5xf32>
    %393 = arith.addf %391, %392 : vector<2x5xf32>
    %394 = arith.index_cast %c3_i32 : i32 to index
    %c0_152 = arith.constant 0 : index
    %c0_153 = arith.constant 0 : index
    %395 = vector.load %arg12[%394, %c0_152, %c0_153] : memref<8x2x5xf32, #tpu.memory_space<vmem>>, vector<1x2x5xf32>
    %396 = vector.shape_cast %395 : vector<1x2x5xf32> to vector<2x5xf32>
    %397 = vector.shape_cast %393 : vector<2x5xf32> to vector<1x2x5xf32>
    tpu.vector_store %arg12[%394, %c0_152, %c0_153], %397 {strides = array<i32>} : memref<8x2x5xf32, #tpu.memory_space<vmem>>, vector<1x2x5xf32>,
    %398 = arith.index_cast %328 : i32 to index
    %c0_154 = arith.constant 0 : index
    %c0_155 = arith.constant 0 : index
    %399 = vector.load %arg12[%398, %c0_154, %c0_155] : memref<8x2x5xf32, #tpu.memory_space<vmem>>, vector<1x2x5xf32>
    %400 = vector.shape_cast %399 : vector<1x2x5xf32> to vector<2x5xf32>
    %cst_156 = arith.constant dense<0.000000e+00> : vector<2x5xf32>
    %401 = tpu.matmul %388, %85, %cst_156 {dimension_numbers = #tpu.dot_dimension_numbers<[1], [0], [0], [1], [0, 0, 1, 1], [], []>} : vector<2x16xf32>, vector<16x5xf32>, vector<2x5xf32> -> vector<2x5xf32>
    %402 = arith.addf %400, %401 : vector<2x5xf32>
    %403 = arith.index_cast %328 : i32 to index
    %c0_157 = arith.constant 0 : index
    %c0_158 = arith.constant 0 : index
    %404 = vector.load %arg12[%403, %c0_157, %c0_158] : memref<8x2x5xf32, #tpu.memory_space<vmem>>, vector<1x2x5xf32>
    %405 = vector.shape_cast %404 : vector<1x2x5xf32> to vector<2x5xf32>
    %406 = vector.shape_cast %402 : vector<2x5xf32> to vector<1x2x5xf32>
    tpu.vector_store %arg12[%403, %c0_157, %c0_158], %406 {strides = array<i32>} : memref<8x2x5xf32, #tpu.memory_space<vmem>>, vector<1x2x5xf32>,
    %c4_i32 = arith.constant 4 : i32
    %c7_i32_159 = arith.constant 7 : i32
    %407 = arith.subi %c7_i32_159, %c4_i32 : i32
    %408 = arith.index_cast %c4_i32 : i32 to index
    %c0_160 = arith.constant 0 : index
    %c0_161 = arith.constant 0 : index
    %409 = vector.load %arg13[%408, %c0_160, %c0_161] : memref<8x2x64xf32, #tpu.memory_space<vmem>>, vector<1x2x64xf32>
    %410 = vector.shape_cast %409 : vector<1x2x64xf32> to vector<2x64xf32>
    %cst_162 = arith.constant dense<0.000000e+00> : vector<2x64xf32>
    %411 = tpu.matmul %358, %82, %cst_162 {dimension_numbers = #tpu.dot_dimension_numbers<[1], [0], [0], [1], [0, 0, 1, 1], [], []>} : vector<2x16xf32>, vector<16x64xf32>, vector<2x64xf32> -> vector<2x64xf32>
    %412 = arith.addf %410, %411 : vector<2x64xf32>
    %413 = vector.extract_strided_slice %412 {offsets = [0, 0], sizes = [2, 16], strides = [1, 1]} : vector<2x64xf32> to vector<2x16xf32>
    %414 = arith.negf %413 : vector<2x16xf32>
    %415 = math.exp %414 : vector<2x16xf32>
    %cst_163 = arith.constant 1.000000e+00 : f32
    %416 = vector.broadcast %cst_163 : f32 to vector<2x16xf32>
    %417 = arith.addf %416, %415 : vector<2x16xf32>
    %418 = arith.divf %416, %417 : vector<2x16xf32>
    %419 = vector.extract_strided_slice %412 {offsets = [0, 16], sizes = [2, 16], strides = [1, 1]} : vector<2x64xf32> to vector<2x16xf32>
    %420 = arith.negf %419 : vector<2x16xf32>
    %421 = math.exp %420 : vector<2x16xf32>
    %cst_164 = arith.constant 1.000000e+00 : f32
    %422 = vector.broadcast %cst_164 : f32 to vector<2x16xf32>
    %423 = arith.addf %422, %421 : vector<2x16xf32>
    %424 = arith.divf %422, %423 : vector<2x16xf32>
    %425 = vector.extract_strided_slice %412 {offsets = [0, 32], sizes = [2, 16], strides = [1, 1]} : vector<2x64xf32> to vector<2x16xf32>
    %426 = math.tanh %425 : vector<2x16xf32>
    %427 = vector.extract_strided_slice %412 {offsets = [0, 48], sizes = [2, 16], strides = [1, 1]} : vector<2x64xf32> to vector<2x16xf32>
    %428 = arith.negf %427 : vector<2x16xf32>
    %429 = math.exp %428 : vector<2x16xf32>
    %cst_165 = arith.constant 1.000000e+00 : f32
    %430 = vector.broadcast %cst_165 : f32 to vector<2x16xf32>
    %431 = arith.addf %430, %429 : vector<2x16xf32>
    %432 = arith.divf %430, %431 : vector<2x16xf32>
    %433 = arith.mulf %424, %356 : vector<2x16xf32>
    %434 = arith.mulf %418, %426 : vector<2x16xf32>
    %435 = arith.addf %433, %434 : vector<2x16xf32>
    %436 = math.tanh %435 : vector<2x16xf32>
    %437 = arith.mulf %432, %436 : vector<2x16xf32>
    %438 = arith.index_cast %407 : i32 to index
    %c0_166 = arith.constant 0 : index
    %c0_167 = arith.constant 0 : index
    %439 = vector.load %arg14[%438, %c0_166, %c0_167] : memref<8x2x64xf32, #tpu.memory_space<vmem>>, vector<1x2x64xf32>
    %440 = vector.shape_cast %439 : vector<1x2x64xf32> to vector<2x64xf32>
    %cst_168 = arith.constant dense<0.000000e+00> : vector<2x64xf32>
    %441 = tpu.matmul %388, %83, %cst_168 {dimension_numbers = #tpu.dot_dimension_numbers<[1], [0], [0], [1], [0, 0, 1, 1], [], []>} : vector<2x16xf32>, vector<16x64xf32>, vector<2x64xf32> -> vector<2x64xf32>
    %442 = arith.addf %440, %441 : vector<2x64xf32>
    %443 = vector.extract_strided_slice %442 {offsets = [0, 0], sizes = [2, 16], strides = [1, 1]} : vector<2x64xf32> to vector<2x16xf32>
    %444 = arith.negf %443 : vector<2x16xf32>
    %445 = math.exp %444 : vector<2x16xf32>
    %cst_169 = arith.constant 1.000000e+00 : f32
    %446 = vector.broadcast %cst_169 : f32 to vector<2x16xf32>
    %447 = arith.addf %446, %445 : vector<2x16xf32>
    %448 = arith.divf %446, %447 : vector<2x16xf32>
    %449 = vector.extract_strided_slice %442 {offsets = [0, 16], sizes = [2, 16], strides = [1, 1]} : vector<2x64xf32> to vector<2x16xf32>
    %450 = arith.negf %449 : vector<2x16xf32>
    %451 = math.exp %450 : vector<2x16xf32>
    %cst_170 = arith.constant 1.000000e+00 : f32
    %452 = vector.broadcast %cst_170 : f32 to vector<2x16xf32>
    %453 = arith.addf %452, %451 : vector<2x16xf32>
    %454 = arith.divf %452, %453 : vector<2x16xf32>
    %455 = vector.extract_strided_slice %442 {offsets = [0, 32], sizes = [2, 16], strides = [1, 1]} : vector<2x64xf32> to vector<2x16xf32>
    %456 = math.tanh %455 : vector<2x16xf32>
    %457 = vector.extract_strided_slice %442 {offsets = [0, 48], sizes = [2, 16], strides = [1, 1]} : vector<2x64xf32> to vector<2x16xf32>
    %458 = arith.negf %457 : vector<2x16xf32>
    %459 = math.exp %458 : vector<2x16xf32>
    %cst_171 = arith.constant 1.000000e+00 : f32
    %460 = vector.broadcast %cst_171 : f32 to vector<2x16xf32>
    %461 = arith.addf %460, %459 : vector<2x16xf32>
    %462 = arith.divf %460, %461 : vector<2x16xf32>
    %463 = arith.mulf %454, %386 : vector<2x16xf32>
    %464 = arith.mulf %448, %456 : vector<2x16xf32>
    %465 = arith.addf %463, %464 : vector<2x16xf32>
    %466 = math.tanh %465 : vector<2x16xf32>
    %467 = arith.mulf %462, %466 : vector<2x16xf32>
    %468 = arith.index_cast %c4_i32 : i32 to index
    %c0_172 = arith.constant 0 : index
    %c0_173 = arith.constant 0 : index
    %469 = vector.load %arg12[%468, %c0_172, %c0_173] : memref<8x2x5xf32, #tpu.memory_space<vmem>>, vector<1x2x5xf32>
    %470 = vector.shape_cast %469 : vector<1x2x5xf32> to vector<2x5xf32>
    %cst_174 = arith.constant dense<0.000000e+00> : vector<2x5xf32>
    %471 = tpu.matmul %437, %84, %cst_174 {dimension_numbers = #tpu.dot_dimension_numbers<[1], [0], [0], [1], [0, 0, 1, 1], [], []>} : vector<2x16xf32>, vector<16x5xf32>, vector<2x5xf32> -> vector<2x5xf32>
    %472 = arith.addf %470, %471 : vector<2x5xf32>
    %473 = arith.index_cast %c4_i32 : i32 to index
    %c0_175 = arith.constant 0 : index
    %c0_176 = arith.constant 0 : index
    %474 = vector.load %arg12[%473, %c0_175, %c0_176] : memref<8x2x5xf32, #tpu.memory_space<vmem>>, vector<1x2x5xf32>
    %475 = vector.shape_cast %474 : vector<1x2x5xf32> to vector<2x5xf32>
    %476 = vector.shape_cast %472 : vector<2x5xf32> to vector<1x2x5xf32>
    tpu.vector_store %arg12[%473, %c0_175, %c0_176], %476 {strides = array<i32>} : memref<8x2x5xf32, #tpu.memory_space<vmem>>, vector<1x2x5xf32>,
    %477 = arith.index_cast %407 : i32 to index
    %c0_177 = arith.constant 0 : index
    %c0_178 = arith.constant 0 : index
    %478 = vector.load %arg12[%477, %c0_177, %c0_178] : memref<8x2x5xf32, #tpu.memory_space<vmem>>, vector<1x2x5xf32>
    %479 = vector.shape_cast %478 : vector<1x2x5xf32> to vector<2x5xf32>
    %cst_179 = arith.constant dense<0.000000e+00> : vector<2x5xf32>
    %480 = tpu.matmul %467, %85, %cst_179 {dimension_numbers = #tpu.dot_dimension_numbers<[1], [0], [0], [1], [0, 0, 1, 1], [], []>} : vector<2x16xf32>, vector<16x5xf32>, vector<2x5xf32> -> vector<2x5xf32>
    %481 = arith.addf %479, %480 : vector<2x5xf32>
    %482 = arith.index_cast %407 : i32 to index
    %c0_180 = arith.constant 0 : index
    %c0_181 = arith.constant 0 : index
    %483 = vector.load %arg12[%482, %c0_180, %c0_181] : memref<8x2x5xf32, #tpu.memory_space<vmem>>, vector<1x2x5xf32>
    %484 = vector.shape_cast %483 : vector<1x2x5xf32> to vector<2x5xf32>
    %485 = vector.shape_cast %481 : vector<2x5xf32> to vector<1x2x5xf32>
    tpu.vector_store %arg12[%482, %c0_180, %c0_181], %485 {strides = array<i32>} : memref<8x2x5xf32, #tpu.memory_space<vmem>>, vector<1x2x5xf32>,
    %c5_i32 = arith.constant 5 : i32
    %c7_i32_182 = arith.constant 7 : i32
    %486 = arith.subi %c7_i32_182, %c5_i32 : i32
    %487 = arith.index_cast %c5_i32 : i32 to index
    %c0_183 = arith.constant 0 : index
    %c0_184 = arith.constant 0 : index
    %488 = vector.load %arg13[%487, %c0_183, %c0_184] : memref<8x2x64xf32, #tpu.memory_space<vmem>>, vector<1x2x64xf32>
    %489 = vector.shape_cast %488 : vector<1x2x64xf32> to vector<2x64xf32>
    %cst_185 = arith.constant dense<0.000000e+00> : vector<2x64xf32>
    %490 = tpu.matmul %437, %82, %cst_185 {dimension_numbers = #tpu.dot_dimension_numbers<[1], [0], [0], [1], [0, 0, 1, 1], [], []>} : vector<2x16xf32>, vector<16x64xf32>, vector<2x64xf32> -> vector<2x64xf32>
    %491 = arith.addf %489, %490 : vector<2x64xf32>
    %492 = vector.extract_strided_slice %491 {offsets = [0, 0], sizes = [2, 16], strides = [1, 1]} : vector<2x64xf32> to vector<2x16xf32>
    %493 = arith.negf %492 : vector<2x16xf32>
    %494 = math.exp %493 : vector<2x16xf32>
    %cst_186 = arith.constant 1.000000e+00 : f32
    %495 = vector.broadcast %cst_186 : f32 to vector<2x16xf32>
    %496 = arith.addf %495, %494 : vector<2x16xf32>
    %497 = arith.divf %495, %496 : vector<2x16xf32>
    %498 = vector.extract_strided_slice %491 {offsets = [0, 16], sizes = [2, 16], strides = [1, 1]} : vector<2x64xf32> to vector<2x16xf32>
    %499 = arith.negf %498 : vector<2x16xf32>
    %500 = math.exp %499 : vector<2x16xf32>
    %cst_187 = arith.constant 1.000000e+00 : f32
    %501 = vector.broadcast %cst_187 : f32 to vector<2x16xf32>
    %502 = arith.addf %501, %500 : vector<2x16xf32>
    %503 = arith.divf %501, %502 : vector<2x16xf32>
    %504 = vector.extract_strided_slice %491 {offsets = [0, 32], sizes = [2, 16], strides = [1, 1]} : vector<2x64xf32> to vector<2x16xf32>
    %505 = math.tanh %504 : vector<2x16xf32>
    %506 = vector.extract_strided_slice %491 {offsets = [0, 48], sizes = [2, 16], strides = [1, 1]} : vector<2x64xf32> to vector<2x16xf32>
    %507 = arith.negf %506 : vector<2x16xf32>
    %508 = math.exp %507 : vector<2x16xf32>
    %cst_188 = arith.constant 1.000000e+00 : f32
    %509 = vector.broadcast %cst_188 : f32 to vector<2x16xf32>
    %510 = arith.addf %509, %508 : vector<2x16xf32>
    %511 = arith.divf %509, %510 : vector<2x16xf32>
    %512 = arith.mulf %503, %435 : vector<2x16xf32>
    %513 = arith.mulf %497, %505 : vector<2x16xf32>
    %514 = arith.addf %512, %513 : vector<2x16xf32>
    %515 = math.tanh %514 : vector<2x16xf32>
    %516 = arith.mulf %511, %515 : vector<2x16xf32>
    %517 = arith.index_cast %486 : i32 to index
    %c0_189 = arith.constant 0 : index
    %c0_190 = arith.constant 0 : index
    %518 = vector.load %arg14[%517, %c0_189, %c0_190] : memref<8x2x64xf32, #tpu.memory_space<vmem>>, vector<1x2x64xf32>
    %519 = vector.shape_cast %518 : vector<1x2x64xf32> to vector<2x64xf32>
    %cst_191 = arith.constant dense<0.000000e+00> : vector<2x64xf32>
    %520 = tpu.matmul %467, %83, %cst_191 {dimension_numbers = #tpu.dot_dimension_numbers<[1], [0], [0], [1], [0, 0, 1, 1], [], []>} : vector<2x16xf32>, vector<16x64xf32>, vector<2x64xf32> -> vector<2x64xf32>
    %521 = arith.addf %519, %520 : vector<2x64xf32>
    %522 = vector.extract_strided_slice %521 {offsets = [0, 0], sizes = [2, 16], strides = [1, 1]} : vector<2x64xf32> to vector<2x16xf32>
    %523 = arith.negf %522 : vector<2x16xf32>
    %524 = math.exp %523 : vector<2x16xf32>
    %cst_192 = arith.constant 1.000000e+00 : f32
    %525 = vector.broadcast %cst_192 : f32 to vector<2x16xf32>
    %526 = arith.addf %525, %524 : vector<2x16xf32>
    %527 = arith.divf %525, %526 : vector<2x16xf32>
    %528 = vector.extract_strided_slice %521 {offsets = [0, 16], sizes = [2, 16], strides = [1, 1]} : vector<2x64xf32> to vector<2x16xf32>
    %529 = arith.negf %528 : vector<2x16xf32>
    %530 = math.exp %529 : vector<2x16xf32>
    %cst_193 = arith.constant 1.000000e+00 : f32
    %531 = vector.broadcast %cst_193 : f32 to vector<2x16xf32>
    %532 = arith.addf %531, %530 : vector<2x16xf32>
    %533 = arith.divf %531, %532 : vector<2x16xf32>
    %534 = vector.extract_strided_slice %521 {offsets = [0, 32], sizes = [2, 16], strides = [1, 1]} : vector<2x64xf32> to vector<2x16xf32>
    %535 = math.tanh %534 : vector<2x16xf32>
    %536 = vector.extract_strided_slice %521 {offsets = [0, 48], sizes = [2, 16], strides = [1, 1]} : vector<2x64xf32> to vector<2x16xf32>
    %537 = arith.negf %536 : vector<2x16xf32>
    %538 = math.exp %537 : vector<2x16xf32>
    %cst_194 = arith.constant 1.000000e+00 : f32
    %539 = vector.broadcast %cst_194 : f32 to vector<2x16xf32>
    %540 = arith.addf %539, %538 : vector<2x16xf32>
    %541 = arith.divf %539, %540 : vector<2x16xf32>
    %542 = arith.mulf %533, %465 : vector<2x16xf32>
    %543 = arith.mulf %527, %535 : vector<2x16xf32>
    %544 = arith.addf %542, %543 : vector<2x16xf32>
    %545 = math.tanh %544 : vector<2x16xf32>
    %546 = arith.mulf %541, %545 : vector<2x16xf32>
    %547 = arith.index_cast %c5_i32 : i32 to index
    %c0_195 = arith.constant 0 : index
    %c0_196 = arith.constant 0 : index
    %548 = vector.load %arg12[%547, %c0_195, %c0_196] : memref<8x2x5xf32, #tpu.memory_space<vmem>>, vector<1x2x5xf32>
    %549 = vector.shape_cast %548 : vector<1x2x5xf32> to vector<2x5xf32>
    %cst_197 = arith.constant dense<0.000000e+00> : vector<2x5xf32>
    %550 = tpu.matmul %516, %84, %cst_197 {dimension_numbers = #tpu.dot_dimension_numbers<[1], [0], [0], [1], [0, 0, 1, 1], [], []>} : vector<2x16xf32>, vector<16x5xf32>, vector<2x5xf32> -> vector<2x5xf32>
    %551 = arith.addf %549, %550 : vector<2x5xf32>
    %552 = arith.index_cast %c5_i32 : i32 to index
    %c0_198 = arith.constant 0 : index
    %c0_199 = arith.constant 0 : index
    %553 = vector.load %arg12[%552, %c0_198, %c0_199] : memref<8x2x5xf32, #tpu.memory_space<vmem>>, vector<1x2x5xf32>
    %554 = vector.shape_cast %553 : vector<1x2x5xf32> to vector<2x5xf32>
    %555 = vector.shape_cast %551 : vector<2x5xf32> to vector<1x2x5xf32>
    tpu.vector_store %arg12[%552, %c0_198, %c0_199], %555 {strides = array<i32>} : memref<8x2x5xf32, #tpu.memory_space<vmem>>, vector<1x2x5xf32>,
    %556 = arith.index_cast %486 : i32 to index
    %c0_200 = arith.constant 0 : index
    %c0_201 = arith.constant 0 : index
    %557 = vector.load %arg12[%556, %c0_200, %c0_201] : memref<8x2x5xf32, #tpu.memory_space<vmem>>, vector<1x2x5xf32>
    %558 = vector.shape_cast %557 : vector<1x2x5xf32> to vector<2x5xf32>
    %cst_202 = arith.constant dense<0.000000e+00> : vector<2x5xf32>
    %559 = tpu.matmul %546, %85, %cst_202 {dimension_numbers = #tpu.dot_dimension_numbers<[1], [0], [0], [1], [0, 0, 1, 1], [], []>} : vector<2x16xf32>, vector<16x5xf32>, vector<2x5xf32> -> vector<2x5xf32>
    %560 = arith.addf %558, %559 : vector<2x5xf32>
    %561 = arith.index_cast %486 : i32 to index
    %c0_203 = arith.constant 0 : index
    %c0_204 = arith.constant 0 : index
    %562 = vector.load %arg12[%561, %c0_203, %c0_204] : memref<8x2x5xf32, #tpu.memory_space<vmem>>, vector<1x2x5xf32>
    %563 = vector.shape_cast %562 : vector<1x2x5xf32> to vector<2x5xf32>
    %564 = vector.shape_cast %560 : vector<2x5xf32> to vector<1x2x5xf32>
    tpu.vector_store %arg12[%561, %c0_203, %c0_204], %564 {strides = array<i32>} : memref<8x2x5xf32, #tpu.memory_space<vmem>>, vector<1x2x5xf32>,
    %c6_i32 = arith.constant 6 : i32
    %c7_i32_205 = arith.constant 7 : i32
    %565 = arith.subi %c7_i32_205, %c6_i32 : i32
    %566 = arith.index_cast %c6_i32 : i32 to index
    %c0_206 = arith.constant 0 : index
    %c0_207 = arith.constant 0 : index
    %567 = vector.load %arg13[%566, %c0_206, %c0_207] : memref<8x2x64xf32, #tpu.memory_space<vmem>>, vector<1x2x64xf32>
    %568 = vector.shape_cast %567 : vector<1x2x64xf32> to vector<2x64xf32>
    %cst_208 = arith.constant dense<0.000000e+00> : vector<2x64xf32>
    %569 = tpu.matmul %516, %82, %cst_208 {dimension_numbers = #tpu.dot_dimension_numbers<[1], [0], [0], [1], [0, 0, 1, 1], [], []>} : vector<2x16xf32>, vector<16x64xf32>, vector<2x64xf32> -> vector<2x64xf32>
    %570 = arith.addf %568, %569 : vector<2x64xf32>
    %571 = vector.extract_strided_slice %570 {offsets = [0, 0], sizes = [2, 16], strides = [1, 1]} : vector<2x64xf32> to vector<2x16xf32>
    %572 = arith.negf %571 : vector<2x16xf32>
    %573 = math.exp %572 : vector<2x16xf32>
    %cst_209 = arith.constant 1.000000e+00 : f32
    %574 = vector.broadcast %cst_209 : f32 to vector<2x16xf32>
    %575 = arith.addf %574, %573 : vector<2x16xf32>
    %576 = arith.divf %574, %575 : vector<2x16xf32>
    %577 = vector.extract_strided_slice %570 {offsets = [0, 16], sizes = [2, 16], strides = [1, 1]} : vector<2x64xf32> to vector<2x16xf32>
    %578 = arith.negf %577 : vector<2x16xf32>
    %579 = math.exp %578 : vector<2x16xf32>
    %cst_210 = arith.constant 1.000000e+00 : f32
    %580 = vector.broadcast %cst_210 : f32 to vector<2x16xf32>
    %581 = arith.addf %580, %579 : vector<2x16xf32>
    %582 = arith.divf %580, %581 : vector<2x16xf32>
    %583 = vector.extract_strided_slice %570 {offsets = [0, 32], sizes = [2, 16], strides = [1, 1]} : vector<2x64xf32> to vector<2x16xf32>
    %584 = math.tanh %583 : vector<2x16xf32>
    %585 = vector.extract_strided_slice %570 {offsets = [0, 48], sizes = [2, 16], strides = [1, 1]} : vector<2x64xf32> to vector<2x16xf32>
    %586 = arith.negf %585 : vector<2x16xf32>
    %587 = math.exp %586 : vector<2x16xf32>
    %cst_211 = arith.constant 1.000000e+00 : f32
    %588 = vector.broadcast %cst_211 : f32 to vector<2x16xf32>
    %589 = arith.addf %588, %587 : vector<2x16xf32>
    %590 = arith.divf %588, %589 : vector<2x16xf32>
    %591 = arith.mulf %582, %514 : vector<2x16xf32>
    %592 = arith.mulf %576, %584 : vector<2x16xf32>
    %593 = arith.addf %591, %592 : vector<2x16xf32>
    %594 = math.tanh %593 : vector<2x16xf32>
    %595 = arith.mulf %590, %594 : vector<2x16xf32>
    %596 = arith.index_cast %565 : i32 to index
    %c0_212 = arith.constant 0 : index
    %c0_213 = arith.constant 0 : index
    %597 = vector.load %arg14[%596, %c0_212, %c0_213] : memref<8x2x64xf32, #tpu.memory_space<vmem>>, vector<1x2x64xf32>
    %598 = vector.shape_cast %597 : vector<1x2x64xf32> to vector<2x64xf32>
    %cst_214 = arith.constant dense<0.000000e+00> : vector<2x64xf32>
    %599 = tpu.matmul %546, %83, %cst_214 {dimension_numbers = #tpu.dot_dimension_numbers<[1], [0], [0], [1], [0, 0, 1, 1], [], []>} : vector<2x16xf32>, vector<16x64xf32>, vector<2x64xf32> -> vector<2x64xf32>
    %600 = arith.addf %598, %599 : vector<2x64xf32>
    %601 = vector.extract_strided_slice %600 {offsets = [0, 0], sizes = [2, 16], strides = [1, 1]} : vector<2x64xf32> to vector<2x16xf32>
    %602 = arith.negf %601 : vector<2x16xf32>
    %603 = math.exp %602 : vector<2x16xf32>
    %cst_215 = arith.constant 1.000000e+00 : f32
    %604 = vector.broadcast %cst_215 : f32 to vector<2x16xf32>
    %605 = arith.addf %604, %603 : vector<2x16xf32>
    %606 = arith.divf %604, %605 : vector<2x16xf32>
    %607 = vector.extract_strided_slice %600 {offsets = [0, 16], sizes = [2, 16], strides = [1, 1]} : vector<2x64xf32> to vector<2x16xf32>
    %608 = arith.negf %607 : vector<2x16xf32>
    %609 = math.exp %608 : vector<2x16xf32>
    %cst_216 = arith.constant 1.000000e+00 : f32
    %610 = vector.broadcast %cst_216 : f32 to vector<2x16xf32>
    %611 = arith.addf %610, %609 : vector<2x16xf32>
    %612 = arith.divf %610, %611 : vector<2x16xf32>
    %613 = vector.extract_strided_slice %600 {offsets = [0, 32], sizes = [2, 16], strides = [1, 1]} : vector<2x64xf32> to vector<2x16xf32>
    %614 = math.tanh %613 : vector<2x16xf32>
    %615 = vector.extract_strided_slice %600 {offsets = [0, 48], sizes = [2, 16], strides = [1, 1]} : vector<2x64xf32> to vector<2x16xf32>
    %616 = arith.negf %615 : vector<2x16xf32>
    %617 = math.exp %616 : vector<2x16xf32>
    %cst_217 = arith.constant 1.000000e+00 : f32
    %618 = vector.broadcast %cst_217 : f32 to vector<2x16xf32>
    %619 = arith.addf %618, %617 : vector<2x16xf32>
    %620 = arith.divf %618, %619 : vector<2x16xf32>
    %621 = arith.mulf %612, %544 : vector<2x16xf32>
    %622 = arith.mulf %606, %614 : vector<2x16xf32>
    %623 = arith.addf %621, %622 : vector<2x16xf32>
    %624 = math.tanh %623 : vector<2x16xf32>
    %625 = arith.mulf %620, %624 : vector<2x16xf32>
    %626 = arith.index_cast %c6_i32 : i32 to index
    %c0_218 = arith.constant 0 : index
    %c0_219 = arith.constant 0 : index
    %627 = vector.load %arg12[%626, %c0_218, %c0_219] : memref<8x2x5xf32, #tpu.memory_space<vmem>>, vector<1x2x5xf32>
    %628 = vector.shape_cast %627 : vector<1x2x5xf32> to vector<2x5xf32>
    %cst_220 = arith.constant dense<0.000000e+00> : vector<2x5xf32>
    %629 = tpu.matmul %595, %84, %cst_220 {dimension_numbers = #tpu.dot_dimension_numbers<[1], [0], [0], [1], [0, 0, 1, 1], [], []>} : vector<2x16xf32>, vector<16x5xf32>, vector<2x5xf32> -> vector<2x5xf32>
    %630 = arith.addf %628, %629 : vector<2x5xf32>
    %631 = arith.index_cast %c6_i32 : i32 to index
    %c0_221 = arith.constant 0 : index
    %c0_222 = arith.constant 0 : index
    %632 = vector.load %arg12[%631, %c0_221, %c0_222] : memref<8x2x5xf32, #tpu.memory_space<vmem>>, vector<1x2x5xf32>
    %633 = vector.shape_cast %632 : vector<1x2x5xf32> to vector<2x5xf32>
    %634 = vector.shape_cast %630 : vector<2x5xf32> to vector<1x2x5xf32>
    tpu.vector_store %arg12[%631, %c0_221, %c0_222], %634 {strides = array<i32>} : memref<8x2x5xf32, #tpu.memory_space<vmem>>, vector<1x2x5xf32>,
    %635 = arith.index_cast %565 : i32 to index
    %c0_223 = arith.constant 0 : index
    %c0_224 = arith.constant 0 : index
    %636 = vector.load %arg12[%635, %c0_223, %c0_224] : memref<8x2x5xf32, #tpu.memory_space<vmem>>, vector<1x2x5xf32>
    %637 = vector.shape_cast %636 : vector<1x2x5xf32> to vector<2x5xf32>
    %cst_225 = arith.constant dense<0.000000e+00> : vector<2x5xf32>
    %638 = tpu.matmul %625, %85, %cst_225 {dimension_numbers = #tpu.dot_dimension_numbers<[1], [0], [0], [1], [0, 0, 1, 1], [], []>} : vector<2x16xf32>, vector<16x5xf32>, vector<2x5xf32> -> vector<2x5xf32>
    %639 = arith.addf %637, %638 : vector<2x5xf32>
    %640 = arith.index_cast %565 : i32 to index
    %c0_226 = arith.constant 0 : index
    %c0_227 = arith.constant 0 : index
    %641 = vector.load %arg12[%640, %c0_226, %c0_227] : memref<8x2x5xf32, #tpu.memory_space<vmem>>, vector<1x2x5xf32>
    %642 = vector.shape_cast %641 : vector<1x2x5xf32> to vector<2x5xf32>
    %643 = vector.shape_cast %639 : vector<2x5xf32> to vector<1x2x5xf32>
    tpu.vector_store %arg12[%640, %c0_226, %c0_227], %643 {strides = array<i32>} : memref<8x2x5xf32, #tpu.memory_space<vmem>>, vector<1x2x5xf32>,
    %c7_i32_228 = arith.constant 7 : i32
    %c7_i32_229 = arith.constant 7 : i32
    %644 = arith.subi %c7_i32_229, %c7_i32_228 : i32
    %645 = arith.index_cast %c7_i32_228 : i32 to index
    %c0_230 = arith.constant 0 : index
    %c0_231 = arith.constant 0 : index
    %646 = vector.load %arg13[%645, %c0_230, %c0_231] : memref<8x2x64xf32, #tpu.memory_space<vmem>>, vector<1x2x64xf32>
    %647 = vector.shape_cast %646 : vector<1x2x64xf32> to vector<2x64xf32>
    %cst_232 = arith.constant dense<0.000000e+00> : vector<2x64xf32>
    %648 = tpu.matmul %595, %82, %cst_232 {dimension_numbers = #tpu.dot_dimension_numbers<[1], [0], [0], [1], [0, 0, 1, 1], [], []>} : vector<2x16xf32>, vector<16x64xf32>, vector<2x64xf32> -> vector<2x64xf32>
    %649 = arith.addf %647, %648 : vector<2x64xf32>
    %650 = vector.extract_strided_slice %649 {offsets = [0, 0], sizes = [2, 16], strides = [1, 1]} : vector<2x64xf32> to vector<2x16xf32>
    %651 = arith.negf %650 : vector<2x16xf32>
    %652 = math.exp %651 : vector<2x16xf32>
    %cst_233 = arith.constant 1.000000e+00 : f32
    %653 = vector.broadcast %cst_233 : f32 to vector<2x16xf32>
    %654 = arith.addf %653, %652 : vector<2x16xf32>
    %655 = arith.divf %653, %654 : vector<2x16xf32>
    %656 = vector.extract_strided_slice %649 {offsets = [0, 16], sizes = [2, 16], strides = [1, 1]} : vector<2x64xf32> to vector<2x16xf32>
    %657 = arith.negf %656 : vector<2x16xf32>
    %658 = math.exp %657 : vector<2x16xf32>
    %cst_234 = arith.constant 1.000000e+00 : f32
    %659 = vector.broadcast %cst_234 : f32 to vector<2x16xf32>
    %660 = arith.addf %659, %658 : vector<2x16xf32>
    %661 = arith.divf %659, %660 : vector<2x16xf32>
    %662 = vector.extract_strided_slice %649 {offsets = [0, 32], sizes = [2, 16], strides = [1, 1]} : vector<2x64xf32> to vector<2x16xf32>
    %663 = math.tanh %662 : vector<2x16xf32>
    %664 = vector.extract_strided_slice %649 {offsets = [0, 48], sizes = [2, 16], strides = [1, 1]} : vector<2x64xf32> to vector<2x16xf32>
    %665 = arith.negf %664 : vector<2x16xf32>
    %666 = math.exp %665 : vector<2x16xf32>
    %cst_235 = arith.constant 1.000000e+00 : f32
    %667 = vector.broadcast %cst_235 : f32 to vector<2x16xf32>
    %668 = arith.addf %667, %666 : vector<2x16xf32>
    %669 = arith.divf %667, %668 : vector<2x16xf32>
    %670 = arith.mulf %661, %593 : vector<2x16xf32>
    %671 = arith.mulf %655, %663 : vector<2x16xf32>
    %672 = arith.addf %670, %671 : vector<2x16xf32>
    %673 = math.tanh %672 : vector<2x16xf32>
    %674 = arith.mulf %669, %673 : vector<2x16xf32>
    %675 = arith.index_cast %644 : i32 to index
    %c0_236 = arith.constant 0 : index
    %c0_237 = arith.constant 0 : index
    %676 = vector.load %arg14[%675, %c0_236, %c0_237] : memref<8x2x64xf32, #tpu.memory_space<vmem>>, vector<1x2x64xf32>
    %677 = vector.shape_cast %676 : vector<1x2x64xf32> to vector<2x64xf32>
    %cst_238 = arith.constant dense<0.000000e+00> : vector<2x64xf32>
    %678 = tpu.matmul %625, %83, %cst_238 {dimension_numbers = #tpu.dot_dimension_numbers<[1], [0], [0], [1], [0, 0, 1, 1], [], []>} : vector<2x16xf32>, vector<16x64xf32>, vector<2x64xf32> -> vector<2x64xf32>
    %679 = arith.addf %677, %678 : vector<2x64xf32>
    %680 = vector.extract_strided_slice %679 {offsets = [0, 0], sizes = [2, 16], strides = [1, 1]} : vector<2x64xf32> to vector<2x16xf32>
    %681 = arith.negf %680 : vector<2x16xf32>
    %682 = math.exp %681 : vector<2x16xf32>
    %cst_239 = arith.constant 1.000000e+00 : f32
    %683 = vector.broadcast %cst_239 : f32 to vector<2x16xf32>
    %684 = arith.addf %683, %682 : vector<2x16xf32>
    %685 = arith.divf %683, %684 : vector<2x16xf32>
    %686 = vector.extract_strided_slice %679 {offsets = [0, 16], sizes = [2, 16], strides = [1, 1]} : vector<2x64xf32> to vector<2x16xf32>
    %687 = arith.negf %686 : vector<2x16xf32>
    %688 = math.exp %687 : vector<2x16xf32>
    %cst_240 = arith.constant 1.000000e+00 : f32
    %689 = vector.broadcast %cst_240 : f32 to vector<2x16xf32>
    %690 = arith.addf %689, %688 : vector<2x16xf32>
    %691 = arith.divf %689, %690 : vector<2x16xf32>
    %692 = vector.extract_strided_slice %679 {offsets = [0, 32], sizes = [2, 16], strides = [1, 1]} : vector<2x64xf32> to vector<2x16xf32>
    %693 = math.tanh %692 : vector<2x16xf32>
    %694 = vector.extract_strided_slice %679 {offsets = [0, 48], sizes = [2, 16], strides = [1, 1]} : vector<2x64xf32> to vector<2x16xf32>
    %695 = arith.negf %694 : vector<2x16xf32>
    %696 = math.exp %695 : vector<2x16xf32>
    %cst_241 = arith.constant 1.000000e+00 : f32
    %697 = vector.broadcast %cst_241 : f32 to vector<2x16xf32>
    %698 = arith.addf %697, %696 : vector<2x16xf32>
    %699 = arith.divf %697, %698 : vector<2x16xf32>
    %700 = arith.mulf %691, %623 : vector<2x16xf32>
    %701 = arith.mulf %685, %693 : vector<2x16xf32>
    %702 = arith.addf %700, %701 : vector<2x16xf32>
    %703 = math.tanh %702 : vector<2x16xf32>
    %704 = arith.mulf %699, %703 : vector<2x16xf32>
    %705 = arith.index_cast %c7_i32_228 : i32 to index
    %c0_242 = arith.constant 0 : index
    %c0_243 = arith.constant 0 : index
    %706 = vector.load %arg12[%705, %c0_242, %c0_243] : memref<8x2x5xf32, #tpu.memory_space<vmem>>, vector<1x2x5xf32>
    %707 = vector.shape_cast %706 : vector<1x2x5xf32> to vector<2x5xf32>
    %cst_244 = arith.constant dense<0.000000e+00> : vector<2x5xf32>
    %708 = tpu.matmul %674, %84, %cst_244 {dimension_numbers = #tpu.dot_dimension_numbers<[1], [0], [0], [1], [0, 0, 1, 1], [], []>} : vector<2x16xf32>, vector<16x5xf32>, vector<2x5xf32> -> vector<2x5xf32>
    %709 = arith.addf %707, %708 : vector<2x5xf32>
    %710 = arith.index_cast %c7_i32_228 : i32 to index
    %c0_245 = arith.constant 0 : index
    %c0_246 = arith.constant 0 : index
    %711 = vector.load %arg12[%710, %c0_245, %c0_246] : memref<8x2x5xf32, #tpu.memory_space<vmem>>, vector<1x2x5xf32>
    %712 = vector.shape_cast %711 : vector<1x2x5xf32> to vector<2x5xf32>
    %713 = vector.shape_cast %709 : vector<2x5xf32> to vector<1x2x5xf32>
    tpu.vector_store %arg12[%710, %c0_245, %c0_246], %713 {strides = array<i32>} : memref<8x2x5xf32, #tpu.memory_space<vmem>>, vector<1x2x5xf32>,
    %714 = arith.index_cast %644 : i32 to index
    %c0_247 = arith.constant 0 : index
    %c0_248 = arith.constant 0 : index
    %715 = vector.load %arg12[%714, %c0_247, %c0_248] : memref<8x2x5xf32, #tpu.memory_space<vmem>>, vector<1x2x5xf32>
    %716 = vector.shape_cast %715 : vector<1x2x5xf32> to vector<2x5xf32>
    %cst_249 = arith.constant dense<0.000000e+00> : vector<2x5xf32>
    %717 = tpu.matmul %704, %85, %cst_249 {dimension_numbers = #tpu.dot_dimension_numbers<[1], [0], [0], [1], [0, 0, 1, 1], [], []>} : vector<2x16xf32>, vector<16x5xf32>, vector<2x5xf32> -> vector<2x5xf32>
    %718 = arith.addf %716, %717 : vector<2x5xf32>
    %719 = arith.index_cast %644 : i32 to index
    %c0_250 = arith.constant 0 : index
    %c0_251 = arith.constant 0 : index
    %720 = vector.load %arg12[%719, %c0_250, %c0_251] : memref<8x2x5xf32, #tpu.memory_space<vmem>>, vector<1x2x5xf32>
    %721 = vector.shape_cast %720 : vector<1x2x5xf32> to vector<2x5xf32>
    %722 = vector.shape_cast %718 : vector<2x5xf32> to vector<1x2x5xf32>
    tpu.vector_store %arg12[%719, %c0_250, %c0_251], %722 {strides = array<i32>} : memref<8x2x5xf32, #tpu.memory_space<vmem>>, vector<1x2x5xf32>,
    %c8_i32 = arith.constant 8 : i32
    return
  }
  func.func @transform_0(%arg0: i32) -> (i32, i32) {
    %c0_i32 = arith.constant 0 : i32
    %c0_i32_0 = arith.constant 0 : i32
    %c0_i32_1 = arith.constant 0 : i32
    return %c0_i32, %c0_i32_0 : i32, i32
  }
  func.func @transform_1(%arg0: i32) -> (i32, i32) {
    %c0_i32 = arith.constant 0 : i32
    %c0_i32_0 = arith.constant 0 : i32
    %c0_i32_1 = arith.constant 0 : i32
    return %c0_i32, %c0_i32_0 : i32, i32
  }
  func.func @transform_2(%arg0: i32) -> (i32, i32) {
    %c0_i32 = arith.constant 0 : i32
    %c0_i32_0 = arith.constant 0 : i32
    %c0_i32_1 = arith.constant 0 : i32
    return %c0_i32, %c0_i32_0 : i32, i32
  }
  func.func @transform_3(%arg0: i32) -> (i32, i32) {
    %c0_i32 = arith.constant 0 : i32
    %c0_i32_0 = arith.constant 0 : i32
    %c0_i32_1 = arith.constant 0 : i32
    return %c0_i32, %c0_i32_0 : i32, i32
  }
  func.func @transform_4(%arg0: i32) -> (i32, i32) {
    %c0_i32 = arith.constant 0 : i32
    %c0_i32_0 = arith.constant 0 : i32
    %c0_i32_1 = arith.constant 0 : i32
    return %c0_i32, %c0_i32_0 : i32, i32
  }
  func.func @transform_5(%arg0: i32) -> (i32, i32) {
    %c0_i32 = arith.constant 0 : i32
    %c0_i32_0 = arith.constant 0 : i32
    %c0_i32_1 = arith.constant 0 : i32
    return %c0_i32, %c0_i32_0 : i32, i32
  }
  func.func @transform_6(%arg0: i32) -> (i32, i32) {
    %c0_i32 = arith.constant 0 : i32
    %c0_i32_0 = arith.constant 0 : i32
    %c0_i32_1 = arith.constant 0 : i32
    return %c0_i32, %c0_i32_0 : i32, i32
  }
  func.func @transform_7(%arg0: i32) -> (i32, i32) {
    %c0_i32 = arith.constant 0 : i32
    %c0_i32_0 = arith.constant 0 : i32
    %c0_i32_1 = arith.constant 0 : i32
    return %c0_i32, %c0_i32_0 : i32, i32
  }
  func.func @transform_8(%arg0: i32) -> (i32, i32) {
    %c0_i32 = arith.constant 0 : i32
    %c0_i32_0 = arith.constant 0 : i32
    %c0_i32_1 = arith.constant 0 : i32
    return %c0_i32, %c0_i32_0 : i32, i32
  }
  func.func @transform_9(%arg0: i32) -> (i32, i32) {
    %c0_i32 = arith.constant 0 : i32
    %c0_i32_0 = arith.constant 0 : i32
    %c0_i32_1 = arith.constant 0 : i32
    return %c0_i32, %c0_i32_0 : i32, i32
  }
  func.func @transform_10(%arg0: i32) -> (i32, i32) {
    %c0_i32 = arith.constant 0 : i32
    %c0_i32_0 = arith.constant 0 : i32
    %c0_i32_1 = arith.constant 0 : i32
    return %c0_i32, %c0_i32_0 : i32, i32
  }
  func.func @transform_11(%arg0: i32) -> (i32, i32, i32) {
    %c0_i32 = arith.constant 0 : i32
    %c0_i32_0 = arith.constant 0 : i32
    %c0_i32_1 = arith.constant 0 : i32
    %c0_i32_2 = arith.constant 0 : i32
    return %c0_i32, %c0_i32_0, %c0_i32_1 : i32, i32, i32
  }
}

</mosaic_0001>

<llo_original>
// kernel: lstm_module_forward.1
$region0: #{lstm_module_forward.1}
  #allocation0 [shape = 'u32[]', space=smem, size = 0x4, offset = 0x4, fixed_abs, tag = 'smem constant byte address 0x4 - core index']
  #allocation1 [shape = 'u32[72,128]{1,0:T(1,128)}', space=vmem, size = 0x9000, scoped, tag = 'internal scratch']
  #allocation2 [shape = 'f32[8,2,64]{2,1,0:T(2,128)}', space=vmem, size = 0x2000, scoped, tag = 'scratch operand']
  #allocation3 [shape = 'f32[8,2,64]{2,1,0:T(2,128)}', space=vmem, size = 0x2000, scoped, tag = 'scratch operand']
  %s0 = inlined_call_operand.vmem [shape: s32[16,1], index: 0, kind: input, shape index: {}]
  %s1 = inlined_call_operand.vmem [shape: f32[20,16], index: 1, kind: input, shape index: {}]
  %s2 = inlined_call_operand.vmem [shape: f32[16,64], index: 2, kind: input, shape index: {}]
  %s3 = inlined_call_operand.vmem [shape: f32[16,64], index: 3, kind: input, shape index: {}]
  %s4 = inlined_call_operand.vmem [shape: f32[1,64], index: 4, kind: input, shape index: {}]
  %s5 = inlined_call_operand.vmem [shape: f32[16,64], index: 5, kind: input, shape index: {}]
  %s6 = inlined_call_operand.vmem [shape: f32[16,64], index: 6, kind: input, shape index: {}]
  %s7 = inlined_call_operand.vmem [shape: f32[1,64], index: 7, kind: input, shape index: {}]
  %s8 = inlined_call_operand.vmem [shape: f32[16,5], index: 8, kind: input, shape index: {}]
  %s9 = inlined_call_operand.vmem [shape: f32[16,5], index: 9, kind: input, shape index: {}]
  %s10 = inlined_call_operand.vmem [shape: f32[1,5], index: 10, kind: input, shape index: {}]
  %s11 = inlined_call_operand.vmem [shape: f32[8,2,5], index: 11, kind: output, shape index: {}]
  %s12 = sld [smem:[#allocation0]]
  $region54: #{lstm_module_forward.1} parent=0
    _
  %s14 = ssub.s32 1, %s12
  %s15 = scalar_select 0, %s14, %s12
  // Predicated region
  $region2: #{lstm_module_forward.1} parent=0 // pred_check
    _
  $region3: #{lstm_module_forward.1} parent=0 // pred_check_branch
    %17 = sbr.rel (0) target = $region5
  $region4: #{lstm_module_forward.1} parent=0 // pred_region
    _
  $region5: #{lstm_module_forward.1} parent=0 // pred_fallthru
    _
  // Predicated region
  $region6: #{lstm_module_forward.1} parent=0 // pred_check
    _
  $region7: #{lstm_module_forward.1} parent=0 // pred_check_branch
    %19 = sbr.rel (0) target = $region9
  $region8: #{lstm_module_forward.1} parent=0 // pred_region
    _
  $region9: #{lstm_module_forward.1} parent=0 // pred_fallthru
    _
  // Predicated region
  $region10: #{lstm_module_forward.1} parent=0 // pred_check
    _
  $region11: #{lstm_module_forward.1} parent=0 // pred_check_branch
    %21 = sbr.rel (0) target = $region13
  $region12: #{lstm_module_forward.1} parent=0 // pred_region
    _
  $region13: #{lstm_module_forward.1} parent=0 // pred_fallthru
    _
  // Predicated region
  $region14: #{lstm_module_forward.1} parent=0 // pred_check
    _
  $region15: #{lstm_module_forward.1} parent=0 // pred_check_branch
    %23 = sbr.rel (0) target = $region17
  $region16: #{lstm_module_forward.1} parent=0 // pred_region
    _
  $region17: #{lstm_module_forward.1} parent=0 // pred_fallthru
    _
  // Predicated region
  $region18: #{lstm_module_forward.1} parent=0 // pred_check
    _
  $region19: #{lstm_module_forward.1} parent=0 // pred_check_branch
    %25 = sbr.rel (0) target = $region21
  $region20: #{lstm_module_forward.1} parent=0 // pred_region
    _
  $region21: #{lstm_module_forward.1} parent=0 // pred_fallthru
    _
  // Predicated region
  $region22: #{lstm_module_forward.1} parent=0 // pred_check
    _
  $region23: #{lstm_module_forward.1} parent=0 // pred_check_branch
    %27 = sbr.rel (0) target = $region25
  $region24: #{lstm_module_forward.1} parent=0 // pred_region
    _
  $region25: #{lstm_module_forward.1} parent=0 // pred_fallthru
    _
  // Predicated region
  $region26: #{lstm_module_forward.1} parent=0 // pred_check
    _
  $region27: #{lstm_module_forward.1} parent=0 // pred_check_branch
    %29 = sbr.rel (0) target = $region29
  $region28: #{lstm_module_forward.1} parent=0 // pred_region
    _
  $region29: #{lstm_module_forward.1} parent=0 // pred_fallthru
    _
  // Predicated region
  $region30: #{lstm_module_forward.1} parent=0 // pred_check
    _
  $region31: #{lstm_module_forward.1} parent=0 // pred_check_branch
    %31 = sbr.rel (0) target = $region33
  $region32: #{lstm_module_forward.1} parent=0 // pred_region
    _
  $region33: #{lstm_module_forward.1} parent=0 // pred_fallthru
    _
  // Predicated region
  $region34: #{lstm_module_forward.1} parent=0 // pred_check
    _
  $region35: #{lstm_module_forward.1} parent=0 // pred_check_branch
    %33 = sbr.rel (0) target = $region37
  $region36: #{lstm_module_forward.1} parent=0 // pred_region
    _
  $region37: #{lstm_module_forward.1} parent=0 // pred_fallthru
    _
  // Predicated region
  $region38: #{lstm_module_forward.1} parent=0 // pred_check
    _
  $region39: #{lstm_module_forward.1} parent=0 // pred_check_branch
    %35 = sbr.rel (0) target = $region41
  $region40: #{lstm_module_forward.1} parent=0 // pred_region
    _
  $region41: #{lstm_module_forward.1} parent=0 // pred_fallthru
    _
  // Predicated region
  $region42: #{lstm_module_forward.1} parent=0 // pred_check
    _
  $region43: #{lstm_module_forward.1} parent=0 // pred_check_branch
    %37 = sbr.rel (0) target = $region45
  $region44: #{lstm_module_forward.1} parent=0 // pred_region
    _
  $region45: #{lstm_module_forward.1} parent=0 // pred_fallthru
    _
  %v38 = vld [vmem:[%s0] sm:$0xff]
  %v39 = vld [vmem:[%s0 + $0x8] sm:$0xff]
  %v40 = vlaneseq
  %v41 = vand.u32 %v40, 127
  %42 = vset.pattern.permute.xlu0 0
  %43 = vperm.xlu0 %42, %v38
  %v44 = vpop.permute.xlu0 %43
  %45 = vset.pattern.permute.xlu0 0
  %46 = vperm.xlu0 %45, %v39
  %v47 = vpop.permute.xlu0 %46
  %vm48 = vcmp.eq.s32.totalorder %v44, %v41
  %vm49 = vcmp.eq.s32.totalorder %v47, %v41
  %v50 = vsel %vm48, 1, 0
  %v51 = vsel %vm49, 1, 0
  %v52 = vcvt.s32.f32 %v50
  %v53 = vcvt.s32.f32 %v51
  %v54 = vld [vmem:[%s1] sm:$0xff]
  %v55 = vld [vmem:[%s1 + $0x8] sm:$0xff]
  %v56 = vld [vmem:[%s1 + $0x10] sm:$0xf]
  %vm57 = vcmask 162816
  %v59 = vsel %vm57, %v52, 0
  %v62 = vsel %vm57, %v53, 0
  %vm64 = vcmask 1043456
  %v66 = vsel %vm64, %v56, 0
  %68 = vmatpush.msra.mxu0 0.0
  %69 = vmatpush.msra.mxu0 0.0
  %70 = vmatpush.msra.mxu0 0.0
  %71 = vmatpush.msra.mxu0 0.0
  %72 = vmatpush.msra.mxu0 0.0
  %73 = vmatpush.msra.mxu0 0.0
  %74 = vmatpush.msra.mxu0 0.0
  %75 = vmatpush.msra.mxu0 0.0
  %76 = vmatpush.msra.mxu0 0.0
  %77 = vmatpush.msra.mxu0 0.0
  %78 = vmatpush.msra.mxu0 0.0
  %79 = vmatpush.msra.mxu0 0.0
  %80 = vmatpush.msra.mxu0 0.0
  %81 = vmatpush.msra.mxu0 %v66
  %82 = vmatpush.msra.mxu0 %v55
  %83 = vmatpush.msra.mxu0 %v54
  %84 = vmatmul.f32.gmra.mxu0 %v59
  %v85 = vpop.f32.mrf.mxu0
  %v86 = vadd.f32 0.0, %v85
  %87 = vmatmul.f32.gmra.mxu0 %v62
  %v88 = vpop.f32.mrf.mxu0
  %v89 = vadd.f32 0.0, %v88
  %90 = vdwg.mxu0
  %v91 = vld [vmem:[%s2] sm:$0xff]
  %v92 = vld [vmem:[%s2 + $0x8] sm:$0xff]
  %v93 = vld [vmem:[%s4] sm:$0x1]
  %v95 = vperm.slane %v93, 0
  %vm97 = vcmask 130048
  %v99 = vsel %vm97, %v86, 0
  %v102 = vsel %vm97, %v89, 0
  %104 = vmatpush.msra.mxu0 0.0
  %105 = vmatpush.msra.mxu0 0.0
  %106 = vmatpush.msra.mxu0 0.0
  %107 = vmatpush.msra.mxu0 0.0
  %108 = vmatpush.msra.mxu0 0.0
  %109 = vmatpush.msra.mxu0 0.0
  %110 = vmatpush.msra.mxu0 0.0
  %111 = vmatpush.msra.mxu0 0.0
  %112 = vmatpush.msra.mxu0 0.0
  %113 = vmatpush.msra.mxu0 0.0
  %114 = vmatpush.msra.mxu0 0.0
  %115 = vmatpush.msra.mxu0 0.0
  %116 = vmatpush.msra.mxu0 0.0
  %117 = vmatpush.msra.mxu0 0.0
  %118 = vmatpush.msra.mxu0 %v92
  %119 = vmatpush.msra.mxu0 %v91
  %120 = vmatmul.f32.gmra.mxu0 %v99
  %v121 = vpop.f32.mrf.mxu0
  %v122 = vadd.f32 %v95, %v121
  %123 = vmatmul.f32.gmra.mxu0 %v102
  %v124 = vpop.f32.mrf.mxu0
  %v125 = vadd.f32 %v95, %v124
  %126 = vdwg.mxu0
  %v127 = vld [vmem:[%s5] sm:$0xff]
  %v128 = vld [vmem:[%s5 + $0x8] sm:$0xff]
  %v129 = vld [vmem:[%s7] sm:$0x1]
  %v131 = vperm.slane %v129, 0
  %133 = vmatpush.msra.mxu0 0.0
  %134 = vmatpush.msra.mxu0 0.0
  %135 = vmatpush.msra.mxu0 0.0
  %136 = vmatpush.msra.mxu0 0.0
  %137 = vmatpush.msra.mxu0 0.0
  %138 = vmatpush.msra.mxu0 0.0
  %139 = vmatpush.msra.mxu0 0.0
  %140 = vmatpush.msra.mxu0 0.0
  %141 = vmatpush.msra.mxu0 0.0
  %142 = vmatpush.msra.mxu0 0.0
  %143 = vmatpush.msra.mxu0 0.0
  %144 = vmatpush.msra.mxu0 0.0
  %145 = vmatpush.msra.mxu0 0.0
  %146 = vmatpush.msra.mxu0 0.0
  %147 = vmatpush.msra.mxu0 %v128
  %148 = vmatpush.msra.mxu0 %v127
  %149 = vmatmul.f32.gmra.mxu0 %v99
  %v150 = vpop.f32.mrf.mxu0
  %v151 = vadd.f32 %v131, %v150
  %152 = vmatmul.f32.gmra.mxu0 %v102
  %v153 = vpop.f32.mrf.mxu0
  %v154 = vadd.f32 %v131, %v153
  %155 = vdwg.mxu0
  %vm156 = vcmask 517120
  %157 = vst.msk [vmem:[#allocation2] sm:$0x3] %vm156, %v122
  %158 = vst.msk [vmem:[#allocation3] sm:$0x3] %vm156, %v151
  %s159 = scalar_lea.vmem [#allocation2], 2
  %vm160 = vcmask 519170
  %161 = vst.msk [vmem:[%s159 - $0x2] sm:$0xc] %vm160, %v122
  %s162 = scalar_lea.vmem [#allocation3], 2
  %163 = vst.msk [vmem:[%s162 - $0x2] sm:$0xc] %vm160, %v151
  %s164 = scalar_lea.vmem [#allocation2], 4
  %vm165 = vcmask 521220
  %166 = vst.msk [vmem:[%s164 - $0x4] sm:$0x30] %vm165, %v122
  %s167 = scalar_lea.vmem [#allocation3], 4
  %168 = vst.msk [vmem:[%s167 - $0x4] sm:$0x30] %vm165, %v151
  %s169 = scalar_lea.vmem [#allocation2], 6
  %vm170 = vcmask 523270
  %171 = vst.msk [vmem:[%s169 - $0x6] sm:$0xc0] %vm170, %v122
  %s172 = scalar_lea.vmem [#allocation3], 6
  %173 = vst.msk [vmem:[%s172 - $0x6] sm:$0xc0] %vm170, %v151
  %s174 = scalar_lea.vmem [#allocation2], 8
  %175 = vst.msk [vmem:[%s174] sm:$0x3] %vm156, %v125
  %s176 = scalar_lea.vmem [#allocation3], 8
  %177 = vst.msk [vmem:[%s176] sm:$0x3] %vm156, %v154
  %s178 = scalar_lea.vmem [#allocation2], 10
  %179 = vst.msk [vmem:[%s178 - $0x2] sm:$0xc] %vm160, %v125
  %s180 = scalar_lea.vmem [#allocation3], 10
  %181 = vst.msk [vmem:[%s180 - $0x2] sm:$0xc] %vm160, %v154
  %s182 = scalar_lea.vmem [#allocation2], 12
  %183 = vst.msk [vmem:[%s182 - $0x4] sm:$0x30] %vm165, %v125
  %s184 = scalar_lea.vmem [#allocation3], 12
  %185 = vst.msk [vmem:[%s184 - $0x4] sm:$0x30] %vm165, %v154
  %s186 = scalar_lea.vmem [#allocation2], 14
  %187 = vst.msk [vmem:[%s186 - $0x6] sm:$0xc0] %vm170, %v125
  %s188 = scalar_lea.vmem [#allocation3], 14
  %189 = vst.msk [vmem:[%s188 - $0x6] sm:$0xc0] %vm170, %v154
  %v190 = vld [vmem:[%s3] sm:$0xff]
  %v191 = vld [vmem:[%s3 + $0x8] sm:$0xff]
  %v192 = vld [vmem:[%s6] sm:$0xff]
  %v193 = vld [vmem:[%s6 + $0x8] sm:$0xff]
  %v194 = vld [vmem:[%s8] sm:$0xff]
  %v195 = vld [vmem:[%s8 + $0x8] sm:$0xff]
  %v196 = vld [vmem:[%s9] sm:$0xff]
  %v197 = vld [vmem:[%s9 + $0x8] sm:$0xff]
  %v198 = vld [vmem:[%s10] sm:$0x1]
  %v200 = vperm.slane %v198, 0
  %vm202 = vcmask 33792
  %203 = vst.msk [vmem:[%s11] sm:$0x3] %vm202, %v200
  %204 = vst.msk [vmem:[%s11 + $0x2] sm:$0x3] %vm202, %v200
  %205 = vst.msk [vmem:[%s11 + $0x4] sm:$0x3] %vm202, %v200
  %206 = vst.msk [vmem:[%s11 + $0x6] sm:$0x3] %vm202, %v200
  %207 = vst.msk [vmem:[%s11 + $0x8] sm:$0x3] %vm202, %v200
  %208 = vst.msk [vmem:[%s11 + $0xa] sm:$0x3] %vm202, %v200
  %209 = vst.msk [vmem:[%s11 + $0xc] sm:$0x3] %vm202, %v200
  %210 = vst.msk [vmem:[%s11 + $0xe] sm:$0x3] %vm202, %v200
  %v211 = vld [vmem:[#allocation2] sm:$0x3]
  %v213 = vsel %vm97, 0.0, 0
  %215 = vmatpush.msra.mxu0 0.0
  %216 = vmatpush.msra.mxu0 0.0
  %217 = vmatpush.msra.mxu0 0.0
  %218 = vmatpush.msra.mxu0 0.0
  %219 = vmatpush.msra.mxu0 0.0
  %220 = vmatpush.msra.mxu0 0.0
  %221 = vmatpush.msra.mxu0 0.0
  %222 = vmatpush.msra.mxu0 0.0
  %223 = vmatpush.msra.mxu0 0.0
  %224 = vmatpush.msra.mxu0 0.0
  %225 = vmatpush.msra.mxu0 0.0
  %226 = vmatpush.msra.mxu0 0.0
  %227 = vmatpush.msra.mxu0 0.0
  %228 = vmatpush.msra.mxu0 0.0
  %229 = vmatpush.msra.mxu0 %v191
  %230 = vmatpush.msra.mxu0 %v190
  %231 = vmatmul.f32.gmra.mxu0 %v213
  %v232 = vpop.f32.mrf.mxu0
  %v233 = vadd.f32 0.0, %v232
  %234 = vdwg.mxu0
  %v235 = vadd.f32 %v211, %v233
  %v236 = vxor.u32 %v235, 2147483648
  %v237 = vmul.f32 %v236, 1.442695
  %v238 = vpow.pop %v237
  %v239 = vadd.f32 %v238, 1.0
  %v240 = vrcp.pop %v239
  %v241 = vmul.f32 %v239, %v240
  %v242 = vsub.f32 1.0, %v241
  %v243 = vmul.f32 %v240, %v242
  %v244 = vadd.f32 %v240, %v243
  %vm245 = vweird.f32 %v239
  %vm246 = vweird.f32 %v240
  %vm247 = vmor %vm245, %vm246
  %v248 = vsel %vm247, %v240, %v244
  %v249 = vand.u32 2147483647, %v239
  %vm250 = vcmp.eq.f32.partialorder %v249, 8.507059e+37
  %v251 = vand.u32 %v239, 2147483648
  %v252 = vor.u32 1.1754944e-38, %v251
  %v253 = vsel %vm250, %v252, %v248
  %v254 = vmul.f32 1.0, %v253
  %v255 = vtanh.pop %v235
  %v256 = vmul.f32 %v254, 0.0
  %258 = vrot.lane.b32.xlu0 %v255, 96
  %v259 = vpop.permute.xlu0 %258
  %v261 = vmul.f32 %v254, %v259
  %263 = vrot.lane.b32.xlu0 %v261, 16
  %v264 = vpop.permute.xlu0 %263
  %v266 = vadd.f32 %v256, %v264
  %v267 = vtanh.pop %v266
  %269 = vrot.lane.b32.xlu0 %v267, 32
  %v270 = vpop.permute.xlu0 %269
  %v272 = vmul.f32 %v254, %v270
  %v273 = vld [vmem:[%s188] sm:$0x3]
  %274 = vmatpush.msra.mxu0 0.0
  %275 = vmatpush.msra.mxu0 0.0
  %276 = vmatpush.msra.mxu0 0.0
  %277 = vmatpush.msra.mxu0 0.0
  %278 = vmatpush.msra.mxu0 0.0
  %279 = vmatpush.msra.mxu0 0.0
  %280 = vmatpush.msra.mxu0 0.0
  %281 = vmatpush.msra.mxu0 0.0
  %282 = vmatpush.msra.mxu0 0.0
  %283 = vmatpush.msra.mxu0 0.0
  %284 = vmatpush.msra.mxu0 0.0
  %285 = vmatpush.msra.mxu0 0.0
  %286 = vmatpush.msra.mxu0 0.0
  %287 = vmatpush.msra.mxu0 0.0
  %288 = vmatpush.msra.mxu0 %v193
  %289 = vmatpush.msra.mxu0 %v192
  %290 = vmatmul.f32.gmra.mxu0 %v213
  %v291 = vpop.f32.mrf.mxu0
  %v292 = vadd.f32 0.0, %v291
  %293 = vdwg.mxu0
  %v294 = vadd.f32 %v273, %v292
  %v295 = vxor.u32 %v294, 2147483648
  %v296 = vmul.f32 %v295, 1.442695
  %v297 = vpow.pop %v296
  %v298 = vadd.f32 %v297, 1.0
  %v299 = vrcp.pop %v298
  %v300 = vmul.f32 %v298, %v299
  %v301 = vsub.f32 1.0, %v300
  %v302 = vmul.f32 %v299, %v301
  %v303 = vadd.f32 %v299, %v302
  %vm304 = vweird.f32 %v298
  %vm305 = vweird.f32 %v299
  %vm306 = vmor %vm304, %vm305
  %v307 = vsel %vm306, %v299, %v303
  %v308 = vand.u32 2147483647, %v298
  %vm309 = vcmp.eq.f32.partialorder %v308, 8.507059e+37
  %v310 = vand.u32 %v298, 2147483648
  %v311 = vor.u32 1.1754944e-38, %v310
  %v312 = vsel %vm309, %v311, %v307
  %v313 = vmul.f32 1.0, %v312
  %v314 = vtanh.pop %v294
  %v315 = vmul.f32 %v313, 0.0
  %317 = vrot.lane.b32.xlu0 %v314, 96
  %v318 = vpop.permute.xlu0 %317
  %v320 = vmul.f32 %v313, %v318
  %322 = vrot.lane.b32.xlu0 %v320, 16
  %v323 = vpop.permute.xlu0 %322
  %v325 = vadd.f32 %v315, %v323
  %v326 = vtanh.pop %v325
  %328 = vrot.lane.b32.xlu0 %v326, 32
  %v329 = vpop.permute.xlu0 %328
  %v331 = vmul.f32 %v313, %v329
  %v332 = vld [vmem:[%s11] sm:$0x3]
  %334 = vrot.lane.b32.xlu0 %v272, 80
  %v335 = vpop.permute.xlu0 %334
  %v336 = vsel %vm97, %v335, 0
  %338 = vmatpush.msra.mxu0 0.0
  %339 = vmatpush.msra.mxu0 0.0
  %340 = vmatpush.msra.mxu0 0.0
  %341 = vmatpush.msra.mxu0 0.0
  %342 = vmatpush.msra.mxu0 0.0
  %343 = vmatpush.msra.mxu0 0.0
  %344 = vmatpush.msra.mxu0 0.0
  %345 = vmatpush.msra.mxu0 0.0
  %346 = vmatpush.msra.mxu0 0.0
  %347 = vmatpush.msra.mxu0 0.0
  %348 = vmatpush.msra.mxu0 0.0
  %349 = vmatpush.msra.mxu0 0.0
  %350 = vmatpush.msra.mxu0 0.0
  %351 = vmatpush.msra.mxu0 0.0
  %352 = vmatpush.msra.mxu0 %v195
  %353 = vmatpush.msra.mxu0 %v194
  %354 = vmatmul.f32.gmra.mxu0 %v336
  %v355 = vpop.f32.mrf.mxu0
  %v356 = vadd.f32 0.0, %v355
  %357 = vdwg.mxu0
  %v358 = vadd.f32 %v332, %v356
  %359 = vst.msk [vmem:[%s11] sm:$0x3] %vm202, %v358
  %s360 = scalar_lea.vmem %s11, 14
  %v361 = vld [vmem:[%s360] sm:$0x3]
  %363 = vrot.lane.b32.xlu0 %v331, 80
  %v364 = vpop.permute.xlu0 %363
  %v365 = vsel %vm97, %v364, 0
  %367 = vmatpush.msra.mxu0 0.0
  %368 = vmatpush.msra.mxu0 0.0
  %369 = vmatpush.msra.mxu0 0.0
  %370 = vmatpush.msra.mxu0 0.0
  %371 = vmatpush.msra.mxu0 0.0
  %372 = vmatpush.msra.mxu0 0.0
  %373 = vmatpush.msra.mxu0 0.0
  %374 = vmatpush.msra.mxu0 0.0
  %375 = vmatpush.msra.mxu0 0.0
  %376 = vmatpush.msra.mxu0 0.0
  %377 = vmatpush.msra.mxu0 0.0
  %378 = vmatpush.msra.mxu0 0.0
  %379 = vmatpush.msra.mxu0 0.0
  %380 = vmatpush.msra.mxu0 0.0
  %381 = vmatpush.msra.mxu0 %v197
  %382 = vmatpush.msra.mxu0 %v196
  %383 = vmatmul.f32.gmra.mxu0 %v365
  %v384 = vpop.f32.mrf.mxu0
  %v385 = vadd.f32 0.0, %v384
  %386 = vdwg.mxu0
  %v387 = vadd.f32 %v361, %v385
  %388 = vst.msk [vmem:[%s360] sm:$0x3] %vm202, %v387
  %v389 = vld [vmem:[%s159] sm:$0x3]
  %390 = vmatpush.msra.mxu0 0.0
  %391 = vmatpush.msra.mxu0 0.0
  %392 = vmatpush.msra.mxu0 0.0
  %393 = vmatpush.msra.mxu0 0.0
  %394 = vmatpush.msra.mxu0 0.0
  %395 = vmatpush.msra.mxu0 0.0
  %396 = vmatpush.msra.mxu0 0.0
  %397 = vmatpush.msra.mxu0 0.0
  %398 = vmatpush.msra.mxu0 0.0
  %399 = vmatpush.msra.mxu0 0.0
  %400 = vmatpush.msra.mxu0 0.0
  %401 = vmatpush.msra.mxu0 0.0
  %402 = vmatpush.msra.mxu0 0.0
  %403 = vmatpush.msra.mxu0 0.0
  %404 = vmatpush.msra.mxu0 %v191
  %405 = vmatpush.msra.mxu0 %v190
  %406 = vmatmul.f32.gmra.mxu0 %v336
  %v407 = vpop.f32.mrf.mxu0
  %v408 = vadd.f32 0.0, %v407
  %409 = vdwg.mxu0
  %v410 = vadd.f32 %v389, %v408
  %v411 = vxor.u32 %v410, 2147483648
  %v412 = vmul.f32 %v411, 1.442695
  %v413 = vpow.pop %v412
  %v414 = vadd.f32 %v413, 1.0
  %v415 = vrcp.pop %v414
  %v416 = vmul.f32 %v414, %v415
  %v417 = vsub.f32 1.0, %v416
  %v418 = vmul.f32 %v415, %v417
  %v419 = vadd.f32 %v415, %v418
  %vm420 = vweird.f32 %v414
  %vm421 = vweird.f32 %v415
  %vm422 = vmor %vm420, %vm421
  %v423 = vsel %vm422, %v415, %v419
  %v424 = vand.u32 2147483647, %v414
  %vm425 = vcmp.eq.f32.partialorder %v424, 8.507059e+37
  %v426 = vand.u32 %v414, 2147483648
  %v427 = vor.u32 1.1754944e-38, %v426
  %v428 = vsel %vm425, %v427, %v423
  %v429 = vmul.f32 1.0, %v428
  %v430 = vtanh.pop %v410
  %v431 = vmul.f32 %v429, %v266
  %433 = vrot.lane.b32.xlu0 %v430, 96
  %v434 = vpop.permute.xlu0 %433
  %v436 = vmul.f32 %v429, %v434
  %438 = vrot.lane.b32.xlu0 %v436, 16
  %v439 = vpop.permute.xlu0 %438
  %v441 = vadd.f32 %v431, %v439
  %v442 = vtanh.pop %v441
  %444 = vrot.lane.b32.xlu0 %v442, 32
  %v445 = vpop.permute.xlu0 %444
  %v447 = vmul.f32 %v429, %v445
  %v448 = vld [vmem:[%s184] sm:$0x3]
  %449 = vmatpush.msra.mxu0 0.0
  %450 = vmatpush.msra.mxu0 0.0
  %451 = vmatpush.msra.mxu0 0.0
  %452 = vmatpush.msra.mxu0 0.0
  %453 = vmatpush.msra.mxu0 0.0
  %454 = vmatpush.msra.mxu0 0.0
  %455 = vmatpush.msra.mxu0 0.0
  %456 = vmatpush.msra.mxu0 0.0
  %457 = vmatpush.msra.mxu0 0.0
  %458 = vmatpush.msra.mxu0 0.0
  %459 = vmatpush.msra.mxu0 0.0
  %460 = vmatpush.msra.mxu0 0.0
  %461 = vmatpush.msra.mxu0 0.0
  %462 = vmatpush.msra.mxu0 0.0
  %463 = vmatpush.msra.mxu0 %v193
  %464 = vmatpush.msra.mxu0 %v192
  %465 = vmatmul.f32.gmra.mxu0 %v365
  %v466 = vpop.f32.mrf.mxu0
  %v467 = vadd.f32 0.0, %v466
  %468 = vdwg.mxu0
  %v469 = vadd.f32 %v448, %v467
  %v470 = vxor.u32 %v469, 2147483648
  %v471 = vmul.f32 %v470, 1.442695
  %v472 = vpow.pop %v471
  %v473 = vadd.f32 %v472, 1.0
  %v474 = vrcp.pop %v473
  %v475 = vmul.f32 %v473, %v474
  %v476 = vsub.f32 1.0, %v475
  %v477 = vmul.f32 %v474, %v476
  %v478 = vadd.f32 %v474, %v477
  %vm479 = vweird.f32 %v473
  %vm480 = vweird.f32 %v474
  %vm481 = vmor %vm479, %vm480
  %v482 = vsel %vm481, %v474, %v478
  %v483 = vand.u32 2147483647, %v473
  %vm484 = vcmp.eq.f32.partialorder %v483, 8.507059e+37
  %v485 = vand.u32 %v473, 2147483648
  %v486 = vor.u32 1.1754944e-38, %v485
  %v487 = vsel %vm484, %v486, %v482
  %v488 = vmul.f32 1.0, %v487
  %v489 = vtanh.pop %v469
  %v490 = vmul.f32 %v488, %v325
  %492 = vrot.lane.b32.xlu0 %v489, 96
  %v493 = vpop.permute.xlu0 %492
  %v495 = vmul.f32 %v488, %v493
  %497 = vrot.lane.b32.xlu0 %v495, 16
  %v498 = vpop.permute.xlu0 %497
  %v500 = vadd.f32 %v490, %v498
  %v501 = vtanh.pop %v500
  %503 = vrot.lane.b32.xlu0 %v501, 32
  %v504 = vpop.permute.xlu0 %503
  %v506 = vmul.f32 %v488, %v504
  %s507 = scalar_lea.vmem %s11, 2
  %v508 = vld [vmem:[%s507] sm:$0x3]
  %510 = vrot.lane.b32.xlu0 %v447, 80
  %v511 = vpop.permute.xlu0 %510
  %v512 = vsel %vm97, %v511, 0
  %514 = vmatpush.msra.mxu0 0.0
  %515 = vmatpush.msra.mxu0 0.0
  %516 = vmatpush.msra.mxu0 0.0
  %517 = vmatpush.msra.mxu0 0.0
  %518 = vmatpush.msra.mxu0 0.0
  %519 = vmatpush.msra.mxu0 0.0
  %520 = vmatpush.msra.mxu0 0.0
  %521 = vmatpush.msra.mxu0 0.0
  %522 = vmatpush.msra.mxu0 0.0
  %523 = vmatpush.msra.mxu0 0.0
  %524 = vmatpush.msra.mxu0 0.0
  %525 = vmatpush.msra.mxu0 0.0
  %526 = vmatpush.msra.mxu0 0.0
  %527 = vmatpush.msra.mxu0 0.0
  %528 = vmatpush.msra.mxu0 %v195
  %529 = vmatpush.msra.mxu0 %v194
  %530 = vmatmul.f32.gmra.mxu0 %v512
  %v531 = vpop.f32.mrf.mxu0
  %v532 = vadd.f32 0.0, %v531
  %533 = vdwg.mxu0
  %v534 = vadd.f32 %v508, %v532
  %535 = vst.msk [vmem:[%s507] sm:$0x3] %vm202, %v534
  %s536 = scalar_lea.vmem %s11, 12
  %v537 = vld [vmem:[%s536] sm:$0x3]
  %539 = vrot.lane.b32.xlu0 %v506, 80
  %v540 = vpop.permute.xlu0 %539
  %v541 = vsel %vm97, %v540, 0
  %543 = vmatpush.msra.mxu0 0.0
  %544 = vmatpush.msra.mxu0 0.0
  %545 = vmatpush.msra.mxu0 0.0
  %546 = vmatpush.msra.mxu0 0.0
  %547 = vmatpush.msra.mxu0 0.0
  %548 = vmatpush.msra.mxu0 0.0
  %549 = vmatpush.msra.mxu0 0.0
  %550 = vmatpush.msra.mxu0 0.0
  %551 = vmatpush.msra.mxu0 0.0
  %552 = vmatpush.msra.mxu0 0.0
  %553 = vmatpush.msra.mxu0 0.0
  %554 = vmatpush.msra.mxu0 0.0
  %555 = vmatpush.msra.mxu0 0.0
  %556 = vmatpush.msra.mxu0 0.0
  %557 = vmatpush.msra.mxu0 %v197
  %558 = vmatpush.msra.mxu0 %v196
  %559 = vmatmul.f32.gmra.mxu0 %v541
  %v560 = vpop.f32.mrf.mxu0
  %v561 = vadd.f32 0.0, %v560
  %562 = vdwg.mxu0
  %v563 = vadd.f32 %v537, %v561
  %564 = vst.msk [vmem:[%s536] sm:$0x3] %vm202, %v563
  %v565 = vld [vmem:[%s164] sm:$0x3]
  %566 = vmatpush.msra.mxu0 0.0
  %567 = vmatpush.msra.mxu0 0.0
  %568 = vmatpush.msra.mxu0 0.0
  %569 = vmatpush.msra.mxu0 0.0
  %570 = vmatpush.msra.mxu0 0.0
  %571 = vmatpush.msra.mxu0 0.0
  %572 = vmatpush.msra.mxu0 0.0
  %573 = vmatpush.msra.mxu0 0.0
  %574 = vmatpush.msra.mxu0 0.0
  %575 = vmatpush.msra.mxu0 0.0
  %576 = vmatpush.msra.mxu0 0.0
  %577 = vmatpush.msra.mxu0 0.0
  %578 = vmatpush.msra.mxu0 0.0
  %579 = vmatpush.msra.mxu0 0.0
  %580 = vmatpush.msra.mxu0 %v191
  %581 = vmatpush.msra.mxu0 %v190
  %582 = vmatmul.f32.gmra.mxu0 %v512
  %v583 = vpop.f32.mrf.mxu0
  %v584 = vadd.f32 0.0, %v583
  %585 = vdwg.mxu0
  %v586 = vadd.f32 %v565, %v584
  %v587 = vxor.u32 %v586, 2147483648
  %v588 = vmul.f32 %v587, 1.442695
  %v589 = vpow.pop %v588
  %v590 = vadd.f32 %v589, 1.0
  %v591 = vrcp.pop %v590
  %v592 = vmul.f32 %v590, %v591
  %v593 = vsub.f32 1.0, %v592
  %v594 = vmul.f32 %v591, %v593
  %v595 = vadd.f32 %v591, %v594
  %vm596 = vweird.f32 %v590
  %vm597 = vweird.f32 %v591
  %vm598 = vmor %vm596, %vm597
  %v599 = vsel %vm598, %v591, %v595
  %v600 = vand.u32 2147483647, %v590
  %vm601 = vcmp.eq.f32.partialorder %v600, 8.507059e+37
  %v602 = vand.u32 %v590, 2147483648
  %v603 = vor.u32 1.1754944e-38, %v602
  %v604 = vsel %vm601, %v603, %v599
  %v605 = vmul.f32 1.0, %v604
  %v606 = vtanh.pop %v586
  %v607 = vmul.f32 %v605, %v441
  %609 = vrot.lane.b32.xlu0 %v606, 96
  %v610 = vpop.permute.xlu0 %609
  %v612 = vmul.f32 %v605, %v610
  %614 = vrot.lane.b32.xlu0 %v612, 16
  %v615 = vpop.permute.xlu0 %614
  %v617 = vadd.f32 %v607, %v615
  %v618 = vtanh.pop %v617
  %620 = vrot.lane.b32.xlu0 %v618, 32
  %v621 = vpop.permute.xlu0 %620
  %v623 = vmul.f32 %v605, %v621
  %v624 = vld [vmem:[%s180] sm:$0x3]
  %625 = vmatpush.msra.mxu0 0.0
  %626 = vmatpush.msra.mxu0 0.0
  %627 = vmatpush.msra.mxu0 0.0
  %628 = vmatpush.msra.mxu0 0.0
  %629 = vmatpush.msra.mxu0 0.0
  %630 = vmatpush.msra.mxu0 0.0
  %631 = vmatpush.msra.mxu0 0.0
  %632 = vmatpush.msra.mxu0 0.0
  %633 = vmatpush.msra.mxu0 0.0
  %634 = vmatpush.msra.mxu0 0.0
  %635 = vmatpush.msra.mxu0 0.0
  %636 = vmatpush.msra.mxu0 0.0
  %637 = vmatpush.msra.mxu0 0.0
  %638 = vmatpush.msra.mxu0 0.0
  %639 = vmatpush.msra.mxu0 %v193
  %640 = vmatpush.msra.mxu0 %v192
  %641 = vmatmul.f32.gmra.mxu0 %v541
  %v642 = vpop.f32.mrf.mxu0
  %v643 = vadd.f32 0.0, %v642
  %644 = vdwg.mxu0
  %v645 = vadd.f32 %v624, %v643
  %v646 = vxor.u32 %v645, 2147483648
  %v647 = vmul.f32 %v646, 1.442695
  %v648 = vpow.pop %v647
  %v649 = vadd.f32 %v648, 1.0
  %v650 = vrcp.pop %v649
  %v651 = vmul.f32 %v649, %v650
  %v652 = vsub.f32 1.0, %v651
  %v653 = vmul.f32 %v650, %v652
  %v654 = vadd.f32 %v650, %v653
  %vm655 = vweird.f32 %v649
  %vm656 = vweird.f32 %v650
  %vm657 = vmor %vm655, %vm656
  %v658 = vsel %vm657, %v650, %v654
  %v659 = vand.u32 2147483647, %v649
  %vm660 = vcmp.eq.f32.partialorder %v659, 8.507059e+37
  %v661 = vand.u32 %v649, 2147483648
  %v662 = vor.u32 1.1754944e-38, %v661
  %v663 = vsel %vm660, %v662, %v658
  %v664 = vmul.f32 1.0, %v663
  %v665 = vtanh.pop %v645
  %v666 = vmul.f32 %v664, %v500
  %668 = vrot.lane.b32.xlu0 %v665, 96
  %v669 = vpop.permute.xlu0 %668
  %v671 = vmul.f32 %v664, %v669
  %673 = vrot.lane.b32.xlu0 %v671, 16
  %v674 = vpop.permute.xlu0 %673
  %v676 = vadd.f32 %v666, %v674
  %v677 = vtanh.pop %v676
  %679 = vrot.lane.b32.xlu0 %v677, 32
  %v680 = vpop.permute.xlu0 %679
  %v682 = vmul.f32 %v664, %v680
  %s683 = scalar_lea.vmem %s11, 4
  %v684 = vld [vmem:[%s683] sm:$0x3]
  %686 = vrot.lane.b32.xlu0 %v623, 80
  %v687 = vpop.permute.xlu0 %686
  %v688 = vsel %vm97, %v687, 0
  %690 = vmatpush.msra.mxu0 0.0
  %691 = vmatpush.msra.mxu0 0.0
  %692 = vmatpush.msra.mxu0 0.0
  %693 = vmatpush.msra.mxu0 0.0
  %694 = vmatpush.msra.mxu0 0.0
  %695 = vmatpush.msra.mxu0 0.0
  %696 = vmatpush.msra.mxu0 0.0
  %697 = vmatpush.msra.mxu0 0.0
  %698 = vmatpush.msra.mxu0 0.0
  %699 = vmatpush.msra.mxu0 0.0
  %700 = vmatpush.msra.mxu0 0.0
  %701 = vmatpush.msra.mxu0 0.0
  %702 = vmatpush.msra.mxu0 0.0
  %703 = vmatpush.msra.mxu0 0.0
  %704 = vmatpush.msra.mxu0 %v195
  %705 = vmatpush.msra.mxu0 %v194
  %706 = vmatmul.f32.gmra.mxu0 %v688
  %v707 = vpop.f32.mrf.mxu0
  %v708 = vadd.f32 0.0, %v707
  %709 = vdwg.mxu0
  %v710 = vadd.f32 %v684, %v708
  %711 = vst.msk [vmem:[%s683] sm:$0x3] %vm202, %v710
  %s712 = scalar_lea.vmem %s11, 10
  %v713 = vld [vmem:[%s712] sm:$0x3]
  %715 = vrot.lane.b32.xlu0 %v682, 80
  %v716 = vpop.permute.xlu0 %715
  %v717 = vsel %vm97, %v716, 0
  %719 = vmatpush.msra.mxu0 0.0
  %720 = vmatpush.msra.mxu0 0.0
  %721 = vmatpush.msra.mxu0 0.0
  %722 = vmatpush.msra.mxu0 0.0
  %723 = vmatpush.msra.mxu0 0.0
  %724 = vmatpush.msra.mxu0 0.0
  %725 = vmatpush.msra.mxu0 0.0
  %726 = vmatpush.msra.mxu0 0.0
  %727 = vmatpush.msra.mxu0 0.0
  %728 = vmatpush.msra.mxu0 0.0
  %729 = vmatpush.msra.mxu0 0.0
  %730 = vmatpush.msra.mxu0 0.0
  %731 = vmatpush.msra.mxu0 0.0
  %732 = vmatpush.msra.mxu0 0.0
  %733 = vmatpush.msra.mxu0 %v197
  %734 = vmatpush.msra.mxu0 %v196
  %735 = vmatmul.f32.gmra.mxu0 %v717
  %v736 = vpop.f32.mrf.mxu0
  %v737 = vadd.f32 0.0, %v736
  %738 = vdwg.mxu0
  %v739 = vadd.f32 %v713, %v737
  %740 = vst.msk [vmem:[%s712] sm:$0x3] %vm202, %v739
  %v741 = vld [vmem:[%s169] sm:$0x3]
  %742 = vmatpush.msra.mxu0 0.0
  %743 = vmatpush.msra.mxu0 0.0
  %744 = vmatpush.msra.mxu0 0.0
  %745 = vmatpush.msra.mxu0 0.0
  %746 = vmatpush.msra.mxu0 0.0
  %747 = vmatpush.msra.mxu0 0.0
  %748 = vmatpush.msra.mxu0 0.0
  %749 = vmatpush.msra.mxu0 0.0
  %750 = vmatpush.msra.mxu0 0.0
  %751 = vmatpush.msra.mxu0 0.0
  %752 = vmatpush.msra.mxu0 0.0
  %753 = vmatpush.msra.mxu0 0.0
  %754 = vmatpush.msra.mxu0 0.0
  %755 = vmatpush.msra.mxu0 0.0
  %756 = vmatpush.msra.mxu0 %v191
  %757 = vmatpush.msra.mxu0 %v190
  %758 = vmatmul.f32.gmra.mxu0 %v688
  %v759 = vpop.f32.mrf.mxu0
  %v760 = vadd.f32 0.0, %v759
  %761 = vdwg.mxu0
  %v762 = vadd.f32 %v741, %v760
  %v763 = vxor.u32 %v762, 2147483648
  %v764 = vmul.f32 %v763, 1.442695
  %v765 = vpow.pop %v764
  %v766 = vadd.f32 %v765, 1.0
  %v767 = vrcp.pop %v766
  %v768 = vmul.f32 %v766, %v767
  %v769 = vsub.f32 1.0, %v768
  %v770 = vmul.f32 %v767, %v769
  %v771 = vadd.f32 %v767, %v770
  %vm772 = vweird.f32 %v766
  %vm773 = vweird.f32 %v767
  %vm774 = vmor %vm772, %vm773
  %v775 = vsel %vm774, %v767, %v771
  %v776 = vand.u32 2147483647, %v766
  %vm777 = vcmp.eq.f32.partialorder %v776, 8.507059e+37
  %v778 = vand.u32 %v766, 2147483648
  %v779 = vor.u32 1.1754944e-38, %v778
  %v780 = vsel %vm777, %v779, %v775
  %v781 = vmul.f32 1.0, %v780
  %v782 = vtanh.pop %v762
  %v783 = vmul.f32 %v781, %v617
  %785 = vrot.lane.b32.xlu0 %v782, 96
  %v786 = vpop.permute.xlu0 %785
  %v788 = vmul.f32 %v781, %v786
  %790 = vrot.lane.b32.xlu0 %v788, 16
  %v791 = vpop.permute.xlu0 %790
  %v793 = vadd.f32 %v783, %v791
  %v794 = vtanh.pop %v793
  %796 = vrot.lane.b32.xlu0 %v794, 32
  %v797 = vpop.permute.xlu0 %796
  %v799 = vmul.f32 %v781, %v797
  %v800 = vld [vmem:[%s176] sm:$0x3]
  %801 = vmatpush.msra.mxu0 0.0
  %802 = vmatpush.msra.mxu0 0.0
  %803 = vmatpush.msra.mxu0 0.0
  %804 = vmatpush.msra.mxu0 0.0
  %805 = vmatpush.msra.mxu0 0.0
  %806 = vmatpush.msra.mxu0 0.0
  %807 = vmatpush.msra.mxu0 0.0
  %808 = vmatpush.msra.mxu0 0.0
  %809 = vmatpush.msra.mxu0 0.0
  %810 = vmatpush.msra.mxu0 0.0
  %811 = vmatpush.msra.mxu0 0.0
  %812 = vmatpush.msra.mxu0 0.0
  %813 = vmatpush.msra.mxu0 0.0
  %814 = vmatpush.msra.mxu0 0.0
  %815 = vmatpush.msra.mxu0 %v193
  %816 = vmatpush.msra.mxu0 %v192
  %817 = vmatmul.f32.gmra.mxu0 %v717
  %v818 = vpop.f32.mrf.mxu0
  %v819 = vadd.f32 0.0, %v818
  %820 = vdwg.mxu0
  %v821 = vadd.f32 %v800, %v819
  %v822 = vxor.u32 %v821, 2147483648
  %v823 = vmul.f32 %v822, 1.442695
  %v824 = vpow.pop %v823
  %v825 = vadd.f32 %v824, 1.0
  %v826 = vrcp.pop %v825
  %v827 = vmul.f32 %v825, %v826
  %v828 = vsub.f32 1.0, %v827
  %v829 = vmul.f32 %v826, %v828
  %v830 = vadd.f32 %v826, %v829
  %vm831 = vweird.f32 %v825
  %vm832 = vweird.f32 %v826
  %vm833 = vmor %vm831, %vm832
  %v834 = vsel %vm833, %v826, %v830
  %v835 = vand.u32 2147483647, %v825
  %vm836 = vcmp.eq.f32.partialorder %v835, 8.507059e+37
  %v837 = vand.u32 %v825, 2147483648
  %v838 = vor.u32 1.1754944e-38, %v837
  %v839 = vsel %vm836, %v838, %v834
  %v840 = vmul.f32 1.0, %v839
  %v841 = vtanh.pop %v821
  %v842 = vmul.f32 %v840, %v676
  %844 = vrot.lane.b32.xlu0 %v841, 96
  %v845 = vpop.permute.xlu0 %844
  %v847 = vmul.f32 %v840, %v845
  %849 = vrot.lane.b32.xlu0 %v847, 16
  %v850 = vpop.permute.xlu0 %849
  %v852 = vadd.f32 %v842, %v850
  %v853 = vtanh.pop %v852
  %855 = vrot.lane.b32.xlu0 %v853, 32
  %v856 = vpop.permute.xlu0 %855
  %v858 = vmul.f32 %v840, %v856
  %s859 = scalar_lea.vmem %s11, 6
  %v860 = vld [vmem:[%s859] sm:$0x3]
  %862 = vrot.lane.b32.xlu0 %v799, 80
  %v863 = vpop.permute.xlu0 %862
  %v864 = vsel %vm97, %v863, 0
  %866 = vmatpush.msra.mxu0 0.0
  %867 = vmatpush.msra.mxu0 0.0
  %868 = vmatpush.msra.mxu0 0.0
  %869 = vmatpush.msra.mxu0 0.0
  %870 = vmatpush.msra.mxu0 0.0
  %871 = vmatpush.msra.mxu0 0.0
  %872 = vmatpush.msra.mxu0 0.0
  %873 = vmatpush.msra.mxu0 0.0
  %874 = vmatpush.msra.mxu0 0.0
  %875 = vmatpush.msra.mxu0 0.0
  %876 = vmatpush.msra.mxu0 0.0
  %877 = vmatpush.msra.mxu0 0.0
  %878 = vmatpush.msra.mxu0 0.0
  %879 = vmatpush.msra.mxu0 0.0
  %880 = vmatpush.msra.mxu0 %v195
  %881 = vmatpush.msra.mxu0 %v194
  %882 = vmatmul.f32.gmra.mxu0 %v864
  %v883 = vpop.f32.mrf.mxu0
  %v884 = vadd.f32 0.0, %v883
  %885 = vdwg.mxu0
  %v886 = vadd.f32 %v860, %v884
  %887 = vst.msk [vmem:[%s859] sm:$0x3] %vm202, %v886
  %s888 = scalar_lea.vmem %s11, 8
  %v889 = vld [vmem:[%s888] sm:$0x3]
  %891 = vrot.lane.b32.xlu0 %v858, 80
  %v892 = vpop.permute.xlu0 %891
  %v893 = vsel %vm97, %v892, 0
  %895 = vmatpush.msra.mxu0 0.0
  %896 = vmatpush.msra.mxu0 0.0
  %897 = vmatpush.msra.mxu0 0.0
  %898 = vmatpush.msra.mxu0 0.0
  %899 = vmatpush.msra.mxu0 0.0
  %900 = vmatpush.msra.mxu0 0.0
  %901 = vmatpush.msra.mxu0 0.0
  %902 = vmatpush.msra.mxu0 0.0
  %903 = vmatpush.msra.mxu0 0.0
  %904 = vmatpush.msra.mxu0 0.0
  %905 = vmatpush.msra.mxu0 0.0
  %906 = vmatpush.msra.mxu0 0.0
  %907 = vmatpush.msra.mxu0 0.0
  %908 = vmatpush.msra.mxu0 0.0
  %909 = vmatpush.msra.mxu0 %v197
  %910 = vmatpush.msra.mxu0 %v196
  %911 = vmatmul.f32.gmra.mxu0 %v893
  %v912 = vpop.f32.mrf.mxu0
  %v913 = vadd.f32 0.0, %v912
  %914 = vdwg.mxu0
  %v915 = vadd.f32 %v889, %v913
  %916 = vst.msk [vmem:[%s888] sm:$0x3] %vm202, %v915
  %v917 = vld [vmem:[%s174] sm:$0x3]
  %918 = vmatpush.msra.mxu0 0.0
  %919 = vmatpush.msra.mxu0 0.0
  %920 = vmatpush.msra.mxu0 0.0
  %921 = vmatpush.msra.mxu0 0.0
  %922 = vmatpush.msra.mxu0 0.0
  %923 = vmatpush.msra.mxu0 0.0
  %924 = vmatpush.msra.mxu0 0.0
  %925 = vmatpush.msra.mxu0 0.0
  %926 = vmatpush.msra.mxu0 0.0
  %927 = vmatpush.msra.mxu0 0.0
  %928 = vmatpush.msra.mxu0 0.0
  %929 = vmatpush.msra.mxu0 0.0
  %930 = vmatpush.msra.mxu0 0.0
  %931 = vmatpush.msra.mxu0 0.0
  %932 = vmatpush.msra.mxu0 %v191
  %933 = vmatpush.msra.mxu0 %v190
  %934 = vmatmul.f32.gmra.mxu0 %v864
  %v935 = vpop.f32.mrf.mxu0
  %v936 = vadd.f32 0.0, %v935
  %937 = vdwg.mxu0
  %v938 = vadd.f32 %v917, %v936
  %v939 = vxor.u32 %v938, 2147483648
  %v940 = vmul.f32 %v939, 1.442695
  %v941 = vpow.pop %v940
  %v942 = vadd.f32 %v941, 1.0
  %v943 = vrcp.pop %v942
  %v944 = vmul.f32 %v942, %v943
  %v945 = vsub.f32 1.0, %v944
  %v946 = vmul.f32 %v943, %v945
  %v947 = vadd.f32 %v943, %v946
  %vm948 = vweird.f32 %v942
  %vm949 = vweird.f32 %v943
  %vm950 = vmor %vm948, %vm949
  %v951 = vsel %vm950, %v943, %v947
  %v952 = vand.u32 2147483647, %v942
  %vm953 = vcmp.eq.f32.partialorder %v952, 8.507059e+37
  %v954 = vand.u32 %v942, 2147483648
  %v955 = vor.u32 1.1754944e-38, %v954
  %v956 = vsel %vm953, %v955, %v951
  %v957 = vmul.f32 1.0, %v956
  %v958 = vtanh.pop %v938
  %v959 = vmul.f32 %v957, %v793
  %961 = vrot.lane.b32.xlu0 %v958, 96
  %v962 = vpop.permute.xlu0 %961
  %v964 = vmul.f32 %v957, %v962
  %966 = vrot.lane.b32.xlu0 %v964, 16
  %v967 = vpop.permute.xlu0 %966
  %v969 = vadd.f32 %v959, %v967
  %v970 = vtanh.pop %v969
  %972 = vrot.lane.b32.xlu0 %v970, 32
  %v973 = vpop.permute.xlu0 %972
  %v975 = vmul.f32 %v957, %v973
  %v976 = vld [vmem:[%s172] sm:$0x3]
  %977 = vmatpush.msra.mxu0 0.0
  %978 = vmatpush.msra.mxu0 0.0
  %979 = vmatpush.msra.mxu0 0.0
  %980 = vmatpush.msra.mxu0 0.0
  %981 = vmatpush.msra.mxu0 0.0
  %982 = vmatpush.msra.mxu0 0.0
  %983 = vmatpush.msra.mxu0 0.0
  %984 = vmatpush.msra.mxu0 0.0
  %985 = vmatpush.msra.mxu0 0.0
  %986 = vmatpush.msra.mxu0 0.0
  %987 = vmatpush.msra.mxu0 0.0
  %988 = vmatpush.msra.mxu0 0.0
  %989 = vmatpush.msra.mxu0 0.0
  %990 = vmatpush.msra.mxu0 0.0
  %991 = vmatpush.msra.mxu0 %v193
  %992 = vmatpush.msra.mxu0 %v192
  %993 = vmatmul.f32.gmra.mxu0 %v893
  %v994 = vpop.f32.mrf.mxu0
  %v995 = vadd.f32 0.0, %v994
  %996 = vdwg.mxu0
  %v997 = vadd.f32 %v976, %v995
  %v998 = vxor.u32 %v997, 2147483648
  %v999 = vmul.f32 %v998, 1.442695
  %v1000 = vpow.pop %v999
  %v1001 = vadd.f32 %v1000, 1.0
  %v1002 = vrcp.pop %v1001
  %v1003 = vmul.f32 %v1001, %v1002
  %v1004 = vsub.f32 1.0, %v1003
  %v1005 = vmul.f32 %v1002, %v1004
  %v1006 = vadd.f32 %v1002, %v1005
  %vm1007 = vweird.f32 %v1001
  %vm1008 = vweird.f32 %v1002
  %vm1009 = vmor %vm1007, %vm1008
  %v1010 = vsel %vm1009, %v1002, %v1006
  %v1011 = vand.u32 2147483647, %v1001
  %vm1012 = vcmp.eq.f32.partialorder %v1011, 8.507059e+37
  %v1013 = vand.u32 %v1001, 2147483648
  %v1014 = vor.u32 1.1754944e-38, %v1013
  %v1015 = vsel %vm1012, %v1014, %v1010
  %v1016 = vmul.f32 1.0, %v1015
  %v1017 = vtanh.pop %v997
  %v1018 = vmul.f32 %v1016, %v852
  %1020 = vrot.lane.b32.xlu0 %v1017, 96
  %v1021 = vpop.permute.xlu0 %1020
  %v1023 = vmul.f32 %v1016, %v1021
  %1025 = vrot.lane.b32.xlu0 %v1023, 16
  %v1026 = vpop.permute.xlu0 %1025
  %v1028 = vadd.f32 %v1018, %v1026
  %v1029 = vtanh.pop %v1028
  %1031 = vrot.lane.b32.xlu0 %v1029, 32
  %v1032 = vpop.permute.xlu0 %1031
  %v1034 = vmul.f32 %v1016, %v1032
  %v1035 = vld [vmem:[%s888] sm:$0x3]
  %1037 = vrot.lane.b32.xlu0 %v975, 80
  %v1038 = vpop.permute.xlu0 %1037
  %v1039 = vsel %vm97, %v1038, 0
  %1041 = vmatpush.msra.mxu0 0.0
  %1042 = vmatpush.msra.mxu0 0.0
  %1043 = vmatpush.msra.mxu0 0.0
  %1044 = vmatpush.msra.mxu0 0.0
  %1045 = vmatpush.msra.mxu0 0.0
  %1046 = vmatpush.msra.mxu0 0.0
  %1047 = vmatpush.msra.mxu0 0.0
  %1048 = vmatpush.msra.mxu0 0.0
  %1049 = vmatpush.msra.mxu0 0.0
  %1050 = vmatpush.msra.mxu0 0.0
  %1051 = vmatpush.msra.mxu0 0.0
  %1052 = vmatpush.msra.mxu0 0.0
  %1053 = vmatpush.msra.mxu0 0.0
  %1054 = vmatpush.msra.mxu0 0.0
  %1055 = vmatpush.msra.mxu0 %v195
  %1056 = vmatpush.msra.mxu0 %v194
  %1057 = vmatmul.f32.gmra.mxu0 %v1039
  %v1058 = vpop.f32.mrf.mxu0
  %v1059 = vadd.f32 0.0, %v1058
  %1060 = vdwg.mxu0
  %v1061 = vadd.f32 %v1035, %v1059
  %1062 = vst.msk [vmem:[%s888] sm:$0x3] %vm202, %v1061
  %v1063 = vld [vmem:[%s859] sm:$0x3]
  %1065 = vrot.lane.b32.xlu0 %v1034, 80
  %v1066 = vpop.permute.xlu0 %1065
  %v1067 = vsel %vm97, %v1066, 0
  %1069 = vmatpush.msra.mxu0 0.0
  %1070 = vmatpush.msra.mxu0 0.0
  %1071 = vmatpush.msra.mxu0 0.0
  %1072 = vmatpush.msra.mxu0 0.0
  %1073 = vmatpush.msra.mxu0 0.0
  %1074 = vmatpush.msra.mxu0 0.0
  %1075 = vmatpush.msra.mxu0 0.0
  %1076 = vmatpush.msra.mxu0 0.0
  %1077 = vmatpush.msra.mxu0 0.0
  %1078 = vmatpush.msra.mxu0 0.0
  %1079 = vmatpush.msra.mxu0 0.0
  %1080 = vmatpush.msra.mxu0 0.0
  %1081 = vmatpush.msra.mxu0 0.0
  %1082 = vmatpush.msra.mxu0 0.0
  %1083 = vmatpush.msra.mxu0 %v197
  %1084 = vmatpush.msra.mxu0 %v196
  %1085 = vmatmul.f32.gmra.mxu0 %v1067
  %v1086 = vpop.f32.mrf.mxu0
  %v1087 = vadd.f32 0.0, %v1086
  %1088 = vdwg.mxu0
  %v1089 = vadd.f32 %v1063, %v1087
  %1090 = vst.msk [vmem:[%s859] sm:$0x3] %vm202, %v1089
  %v1091 = vld [vmem:[%s178] sm:$0x3]
  %1092 = vmatpush.msra.mxu0 0.0
  %1093 = vmatpush.msra.mxu0 0.0
  %1094 = vmatpush.msra.mxu0 0.0
  %1095 = vmatpush.msra.mxu0 0.0
  %1096 = vmatpush.msra.mxu0 0.0
  %1097 = vmatpush.msra.mxu0 0.0
  %1098 = vmatpush.msra.mxu0 0.0
  %1099 = vmatpush.msra.mxu0 0.0
  %1100 = vmatpush.msra.mxu0 0.0
  %1101 = vmatpush.msra.mxu0 0.0
  %1102 = vmatpush.msra.mxu0 0.0
  %1103 = vmatpush.msra.mxu0 0.0
  %1104 = vmatpush.msra.mxu0 0.0
  %1105 = vmatpush.msra.mxu0 0.0
  %1106 = vmatpush.msra.mxu0 %v191
  %1107 = vmatpush.msra.mxu0 %v190
  %1108 = vmatmul.f32.gmra.mxu0 %v1039
  %v1109 = vpop.f32.mrf.mxu0
  %v1110 = vadd.f32 0.0, %v1109
  %1111 = vdwg.mxu0
  %v1112 = vadd.f32 %v1091, %v1110
  %v1113 = vxor.u32 %v1112, 2147483648
  %v1114 = vmul.f32 %v1113, 1.442695
  %v1115 = vpow.pop %v1114
  %v1116 = vadd.f32 %v1115, 1.0
  %v1117 = vrcp.pop %v1116
  %v1118 = vmul.f32 %v1116, %v1117
  %v1119 = vsub.f32 1.0, %v1118
  %v1120 = vmul.f32 %v1117, %v1119
  %v1121 = vadd.f32 %v1117, %v1120
  %vm1122 = vweird.f32 %v1116
  %vm1123 = vweird.f32 %v1117
  %vm1124 = vmor %vm1122, %vm1123
  %v1125 = vsel %vm1124, %v1117, %v1121
  %v1126 = vand.u32 2147483647, %v1116
  %vm1127 = vcmp.eq.f32.partialorder %v1126, 8.507059e+37
  %v1128 = vand.u32 %v1116, 2147483648
  %v1129 = vor.u32 1.1754944e-38, %v1128
  %v1130 = vsel %vm1127, %v1129, %v1125
  %v1131 = vmul.f32 1.0, %v1130
  %v1132 = vtanh.pop %v1112
  %v1133 = vmul.f32 %v1131, %v969
  %1135 = vrot.lane.b32.xlu0 %v1132, 96
  %v1136 = vpop.permute.xlu0 %1135
  %v1138 = vmul.f32 %v1131, %v1136
  %1140 = vrot.lane.b32.xlu0 %v1138, 16
  %v1141 = vpop.permute.xlu0 %1140
  %v1143 = vadd.f32 %v1133, %v1141
  %v1144 = vtanh.pop %v1143
  %1146 = vrot.lane.b32.xlu0 %v1144, 32
  %v1147 = vpop.permute.xlu0 %1146
  %v1149 = vmul.f32 %v1131, %v1147
  %v1150 = vld [vmem:[%s167] sm:$0x3]
  %1151 = vmatpush.msra.mxu0 0.0
  %1152 = vmatpush.msra.mxu0 0.0
  %1153 = vmatpush.msra.mxu0 0.0
  %1154 = vmatpush.msra.mxu0 0.0
  %1155 = vmatpush.msra.mxu0 0.0
  %1156 = vmatpush.msra.mxu0 0.0
  %1157 = vmatpush.msra.mxu0 0.0
  %1158 = vmatpush.msra.mxu0 0.0
  %1159 = vmatpush.msra.mxu0 0.0
  %1160 = vmatpush.msra.mxu0 0.0
  %1161 = vmatpush.msra.mxu0 0.0
  %1162 = vmatpush.msra.mxu0 0.0
  %1163 = vmatpush.msra.mxu0 0.0
  %1164 = vmatpush.msra.mxu0 0.0
  %1165 = vmatpush.msra.mxu0 %v193
  %1166 = vmatpush.msra.mxu0 %v192
  %1167 = vmatmul.f32.gmra.mxu0 %v1067
  %v1168 = vpop.f32.mrf.mxu0
  %v1169 = vadd.f32 0.0, %v1168
  %1170 = vdwg.mxu0
  %v1171 = vadd.f32 %v1150, %v1169
  %v1172 = vxor.u32 %v1171, 2147483648
  %v1173 = vmul.f32 %v1172, 1.442695
  %v1174 = vpow.pop %v1173
  %v1175 = vadd.f32 %v1174, 1.0
  %v1176 = vrcp.pop %v1175
  %v1177 = vmul.f32 %v1175, %v1176
  %v1178 = vsub.f32 1.0, %v1177
  %v1179 = vmul.f32 %v1176, %v1178
  %v1180 = vadd.f32 %v1176, %v1179
  %vm1181 = vweird.f32 %v1175
  %vm1182 = vweird.f32 %v1176
  %vm1183 = vmor %vm1181, %vm1182
  %v1184 = vsel %vm1183, %v1176, %v1180
  %v1185 = vand.u32 2147483647, %v1175
  %vm1186 = vcmp.eq.f32.partialorder %v1185, 8.507059e+37
  %v1187 = vand.u32 %v1175, 2147483648
  %v1188 = vor.u32 1.1754944e-38, %v1187
  %v1189 = vsel %vm1186, %v1188, %v1184
  %v1190 = vmul.f32 1.0, %v1189
  %v1191 = vtanh.pop %v1171
  %v1192 = vmul.f32 %v1190, %v1028
  %1194 = vrot.lane.b32.xlu0 %v1191, 96
  %v1195 = vpop.permute.xlu0 %1194
  %v1197 = vmul.f32 %v1190, %v1195
  %1199 = vrot.lane.b32.xlu0 %v1197, 16
  %v1200 = vpop.permute.xlu0 %1199
  %v1202 = vadd.f32 %v1192, %v1200
  %v1203 = vtanh.pop %v1202
  %1205 = vrot.lane.b32.xlu0 %v1203, 32
  %v1206 = vpop.permute.xlu0 %1205
  %v1208 = vmul.f32 %v1190, %v1206
  %v1209 = vld [vmem:[%s712] sm:$0x3]
  %1211 = vrot.lane.b32.xlu0 %v1149, 80
  %v1212 = vpop.permute.xlu0 %1211
  %v1213 = vsel %vm97, %v1212, 0
  %1215 = vmatpush.msra.mxu0 0.0
  %1216 = vmatpush.msra.mxu0 0.0
  %1217 = vmatpush.msra.mxu0 0.0
  %1218 = vmatpush.msra.mxu0 0.0
  %1219 = vmatpush.msra.mxu0 0.0
  %1220 = vmatpush.msra.mxu0 0.0
  %1221 = vmatpush.msra.mxu0 0.0
  %1222 = vmatpush.msra.mxu0 0.0
  %1223 = vmatpush.msra.mxu0 0.0
  %1224 = vmatpush.msra.mxu0 0.0
  %1225 = vmatpush.msra.mxu0 0.0
  %1226 = vmatpush.msra.mxu0 0.0
  %1227 = vmatpush.msra.mxu0 0.0
  %1228 = vmatpush.msra.mxu0 0.0
  %1229 = vmatpush.msra.mxu0 %v195
  %1230 = vmatpush.msra.mxu0 %v194
  %1231 = vmatmul.f32.gmra.mxu0 %v1213
  %v1232 = vpop.f32.mrf.mxu0
  %v1233 = vadd.f32 0.0, %v1232
  %1234 = vdwg.mxu0
  %v1235 = vadd.f32 %v1209, %v1233
  %1236 = vst.msk [vmem:[%s712] sm:$0x3] %vm202, %v1235
  %v1237 = vld [vmem:[%s683] sm:$0x3]
  %1239 = vrot.lane.b32.xlu0 %v1208, 80
  %v1240 = vpop.permute.xlu0 %1239
  %v1241 = vsel %vm97, %v1240, 0
  %1243 = vmatpush.msra.mxu0 0.0
  %1244 = vmatpush.msra.mxu0 0.0
  %1245 = vmatpush.msra.mxu0 0.0
  %1246 = vmatpush.msra.mxu0 0.0
  %1247 = vmatpush.msra.mxu0 0.0
  %1248 = vmatpush.msra.mxu0 0.0
  %1249 = vmatpush.msra.mxu0 0.0
  %1250 = vmatpush.msra.mxu0 0.0
  %1251 = vmatpush.msra.mxu0 0.0
  %1252 = vmatpush.msra.mxu0 0.0
  %1253 = vmatpush.msra.mxu0 0.0
  %1254 = vmatpush.msra.mxu0 0.0
  %1255 = vmatpush.msra.mxu0 0.0
  %1256 = vmatpush.msra.mxu0 0.0
  %1257 = vmatpush.msra.mxu0 %v197
  %1258 = vmatpush.msra.mxu0 %v196
  %1259 = vmatmul.f32.gmra.mxu0 %v1241
  %v1260 = vpop.f32.mrf.mxu0
  %v1261 = vadd.f32 0.0, %v1260
  %1262 = vdwg.mxu0
  %v1263 = vadd.f32 %v1237, %v1261
  %1264 = vst.msk [vmem:[%s683] sm:$0x3] %vm202, %v1263
  %v1265 = vld [vmem:[%s182] sm:$0x3]
  %1266 = vmatpush.msra.mxu0 0.0
  %1267 = vmatpush.msra.mxu0 0.0
  %1268 = vmatpush.msra.mxu0 0.0
  %1269 = vmatpush.msra.mxu0 0.0
  %1270 = vmatpush.msra.mxu0 0.0
  %1271 = vmatpush.msra.mxu0 0.0
  %1272 = vmatpush.msra.mxu0 0.0
  %1273 = vmatpush.msra.mxu0 0.0
  %1274 = vmatpush.msra.mxu0 0.0
  %1275 = vmatpush.msra.mxu0 0.0
  %1276 = vmatpush.msra.mxu0 0.0
  %1277 = vmatpush.msra.mxu0 0.0
  %1278 = vmatpush.msra.mxu0 0.0
  %1279 = vmatpush.msra.mxu0 0.0
  %1280 = vmatpush.msra.mxu0 %v191
  %1281 = vmatpush.msra.mxu0 %v190
  %1282 = vmatmul.f32.gmra.mxu0 %v1213
  %v1283 = vpop.f32.mrf.mxu0
  %v1284 = vadd.f32 0.0, %v1283
  %1285 = vdwg.mxu0
  %v1286 = vadd.f32 %v1265, %v1284
  %v1287 = vxor.u32 %v1286, 2147483648
  %v1288 = vmul.f32 %v1287, 1.442695
  %v1289 = vpow.pop %v1288
  %v1290 = vadd.f32 %v1289, 1.0
  %v1291 = vrcp.pop %v1290
  %v1292 = vmul.f32 %v1290, %v1291
  %v1293 = vsub.f32 1.0, %v1292
  %v1294 = vmul.f32 %v1291, %v1293
  %v1295 = vadd.f32 %v1291, %v1294
  %vm1296 = vweird.f32 %v1290
  %vm1297 = vweird.f32 %v1291
  %vm1298 = vmor %vm1296, %vm1297
  %v1299 = vsel %vm1298, %v1291, %v1295
  %v1300 = vand.u32 2147483647, %v1290
  %vm1301 = vcmp.eq.f32.partialorder %v1300, 8.507059e+37
  %v1302 = vand.u32 %v1290, 2147483648
  %v1303 = vor.u32 1.1754944e-38, %v1302
  %v1304 = vsel %vm1301, %v1303, %v1299
  %v1305 = vmul.f32 1.0, %v1304
  %v1306 = vtanh.pop %v1286
  %v1307 = vmul.f32 %v1305, %v1143
  %1309 = vrot.lane.b32.xlu0 %v1306, 96
  %v1310 = vpop.permute.xlu0 %1309
  %v1312 = vmul.f32 %v1305, %v1310
  %1314 = vrot.lane.b32.xlu0 %v1312, 16
  %v1315 = vpop.permute.xlu0 %1314
  %v1317 = vadd.f32 %v1307, %v1315
  %v1318 = vtanh.pop %v1317
  %1320 = vrot.lane.b32.xlu0 %v1318, 32
  %v1321 = vpop.permute.xlu0 %1320
  %v1323 = vmul.f32 %v1305, %v1321
  %v1324 = vld [vmem:[%s162] sm:$0x3]
  %1325 = vmatpush.msra.mxu0 0.0
  %1326 = vmatpush.msra.mxu0 0.0
  %1327 = vmatpush.msra.mxu0 0.0
  %1328 = vmatpush.msra.mxu0 0.0
  %1329 = vmatpush.msra.mxu0 0.0
  %1330 = vmatpush.msra.mxu0 0.0
  %1331 = vmatpush.msra.mxu0 0.0
  %1332 = vmatpush.msra.mxu0 0.0
  %1333 = vmatpush.msra.mxu0 0.0
  %1334 = vmatpush.msra.mxu0 0.0
  %1335 = vmatpush.msra.mxu0 0.0
  %1336 = vmatpush.msra.mxu0 0.0
  %1337 = vmatpush.msra.mxu0 0.0
  %1338 = vmatpush.msra.mxu0 0.0
  %1339 = vmatpush.msra.mxu0 %v193
  %1340 = vmatpush.msra.mxu0 %v192
  %1341 = vmatmul.f32.gmra.mxu0 %v1241
  %v1342 = vpop.f32.mrf.mxu0
  %v1343 = vadd.f32 0.0, %v1342
  %1344 = vdwg.mxu0
  %v1345 = vadd.f32 %v1324, %v1343
  %v1346 = vxor.u32 %v1345, 2147483648
  %v1347 = vmul.f32 %v1346, 1.442695
  %v1348 = vpow.pop %v1347
  %v1349 = vadd.f32 %v1348, 1.0
  %v1350 = vrcp.pop %v1349
  %v1351 = vmul.f32 %v1349, %v1350
  %v1352 = vsub.f32 1.0, %v1351
  %v1353 = vmul.f32 %v1350, %v1352
  %v1354 = vadd.f32 %v1350, %v1353
  %vm1355 = vweird.f32 %v1349
  %vm1356 = vweird.f32 %v1350
  %vm1357 = vmor %vm1355, %vm1356
  %v1358 = vsel %vm1357, %v1350, %v1354
  %v1359 = vand.u32 2147483647, %v1349
  %vm1360 = vcmp.eq.f32.partialorder %v1359, 8.507059e+37
  %v1361 = vand.u32 %v1349, 2147483648
  %v1362 = vor.u32 1.1754944e-38, %v1361
  %v1363 = vsel %vm1360, %v1362, %v1358
  %v1364 = vmul.f32 1.0, %v1363
  %v1365 = vtanh.pop %v1345
  %v1366 = vmul.f32 %v1364, %v1202
  %1368 = vrot.lane.b32.xlu0 %v1365, 96
  %v1369 = vpop.permute.xlu0 %1368
  %v1371 = vmul.f32 %v1364, %v1369
  %1373 = vrot.lane.b32.xlu0 %v1371, 16
  %v1374 = vpop.permute.xlu0 %1373
  %v1376 = vadd.f32 %v1366, %v1374
  %v1377 = vtanh.pop %v1376
  %1379 = vrot.lane.b32.xlu0 %v1377, 32
  %v1380 = vpop.permute.xlu0 %1379
  %v1382 = vmul.f32 %v1364, %v1380
  %v1383 = vld [vmem:[%s536] sm:$0x3]
  %1385 = vrot.lane.b32.xlu0 %v1323, 80
  %v1386 = vpop.permute.xlu0 %1385
  %v1387 = vsel %vm97, %v1386, 0
  %1389 = vmatpush.msra.mxu0 0.0
  %1390 = vmatpush.msra.mxu0 0.0
  %1391 = vmatpush.msra.mxu0 0.0
  %1392 = vmatpush.msra.mxu0 0.0
  %1393 = vmatpush.msra.mxu0 0.0
  %1394 = vmatpush.msra.mxu0 0.0
  %1395 = vmatpush.msra.mxu0 0.0
  %1396 = vmatpush.msra.mxu0 0.0
  %1397 = vmatpush.msra.mxu0 0.0
  %1398 = vmatpush.msra.mxu0 0.0
  %1399 = vmatpush.msra.mxu0 0.0
  %1400 = vmatpush.msra.mxu0 0.0
  %1401 = vmatpush.msra.mxu0 0.0
  %1402 = vmatpush.msra.mxu0 0.0
  %1403 = vmatpush.msra.mxu0 %v195
  %1404 = vmatpush.msra.mxu0 %v194
  %1405 = vmatmul.f32.gmra.mxu0 %v1387
  %v1406 = vpop.f32.mrf.mxu0
  %v1407 = vadd.f32 0.0, %v1406
  %1408 = vdwg.mxu0
  %v1409 = vadd.f32 %v1383, %v1407
  %1410 = vst.msk [vmem:[%s536] sm:$0x3] %vm202, %v1409
  %v1411 = vld [vmem:[%s507] sm:$0x3]
  %1413 = vrot.lane.b32.xlu0 %v1382, 80
  %v1414 = vpop.permute.xlu0 %1413
  %v1415 = vsel %vm97, %v1414, 0
  %1417 = vmatpush.msra.mxu0 0.0
  %1418 = vmatpush.msra.mxu0 0.0
  %1419 = vmatpush.msra.mxu0 0.0
  %1420 = vmatpush.msra.mxu0 0.0
  %1421 = vmatpush.msra.mxu0 0.0
  %1422 = vmatpush.msra.mxu0 0.0
  %1423 = vmatpush.msra.mxu0 0.0
  %1424 = vmatpush.msra.mxu0 0.0
  %1425 = vmatpush.msra.mxu0 0.0
  %1426 = vmatpush.msra.mxu0 0.0
  %1427 = vmatpush.msra.mxu0 0.0
  %1428 = vmatpush.msra.mxu0 0.0
  %1429 = vmatpush.msra.mxu0 0.0
  %1430 = vmatpush.msra.mxu0 0.0
  %1431 = vmatpush.msra.mxu0 %v197
  %1432 = vmatpush.msra.mxu0 %v196
  %1433 = vmatmul.f32.gmra.mxu0 %v1415
  %v1434 = vpop.f32.mrf.mxu0
  %v1435 = vadd.f32 0.0, %v1434
  %1436 = vdwg.mxu0
  %v1437 = vadd.f32 %v1411, %v1435
  %1438 = vst.msk [vmem:[%s507] sm:$0x3] %vm202, %v1437
  %v1439 = vld [vmem:[%s186] sm:$0x3]
  %1440 = vmatpush.msra.mxu0 0.0
  %1441 = vmatpush.msra.mxu0 0.0
  %1442 = vmatpush.msra.mxu0 0.0
  %1443 = vmatpush.msra.mxu0 0.0
  %1444 = vmatpush.msra.mxu0 0.0
  %1445 = vmatpush.msra.mxu0 0.0
  %1446 = vmatpush.msra.mxu0 0.0
  %1447 = vmatpush.msra.mxu0 0.0
  %1448 = vmatpush.msra.mxu0 0.0
  %1449 = vmatpush.msra.mxu0 0.0
  %1450 = vmatpush.msra.mxu0 0.0
  %1451 = vmatpush.msra.mxu0 0.0
  %1452 = vmatpush.msra.mxu0 0.0
  %1453 = vmatpush.msra.mxu0 0.0
  %1454 = vmatpush.msra.mxu0 %v191
  %1455 = vmatpush.msra.mxu0 %v190
  %1456 = vmatmul.f32.gmra.mxu0 %v1387
  %v1457 = vpop.f32.mrf.mxu0
  %v1458 = vadd.f32 0.0, %v1457
  %1459 = vdwg.mxu0
  %v1460 = vadd.f32 %v1439, %v1458
  %v1461 = vxor.u32 %v1460, 2147483648
  %v1462 = vmul.f32 %v1461, 1.442695
  %v1463 = vpow.pop %v1462
  %v1464 = vadd.f32 %v1463, 1.0
  %v1465 = vrcp.pop %v1464
  %v1466 = vmul.f32 %v1464, %v1465
  %v1467 = vsub.f32 1.0, %v1466
  %v1468 = vmul.f32 %v1465, %v1467
  %v1469 = vadd.f32 %v1465, %v1468
  %vm1470 = vweird.f32 %v1464
  %vm1471 = vweird.f32 %v1465
  %vm1472 = vmor %vm1470, %vm1471
  %v1473 = vsel %vm1472, %v1465, %v1469
  %v1474 = vand.u32 2147483647, %v1464
  %vm1475 = vcmp.eq.f32.partialorder %v1474, 8.507059e+37
  %v1476 = vand.u32 %v1464, 2147483648
  %v1477 = vor.u32 1.1754944e-38, %v1476
  %v1478 = vsel %vm1475, %v1477, %v1473
  %v1479 = vmul.f32 1.0, %v1478
  %v1480 = vtanh.pop %v1460
  %v1481 = vmul.f32 %v1479, %v1317
  %1483 = vrot.lane.b32.xlu0 %v1480, 96
  %v1484 = vpop.permute.xlu0 %1483
  %v1486 = vmul.f32 %v1479, %v1484
  %1488 = vrot.lane.b32.xlu0 %v1486, 16
  %v1489 = vpop.permute.xlu0 %1488
  %v1491 = vadd.f32 %v1481, %v1489
  %v1492 = vtanh.pop %v1491
  %1494 = vrot.lane.b32.xlu0 %v1492, 32
  %v1495 = vpop.permute.xlu0 %1494
  %v1497 = vmul.f32 %v1479, %v1495
  %v1498 = vld [vmem:[#allocation3] sm:$0x3]
  %1499 = vmatpush.msra.mxu0 0.0
  %1500 = vmatpush.msra.mxu0 0.0
  %1501 = vmatpush.msra.mxu0 0.0
  %1502 = vmatpush.msra.mxu0 0.0
  %1503 = vmatpush.msra.mxu0 0.0
  %1504 = vmatpush.msra.mxu0 0.0
  %1505 = vmatpush.msra.mxu0 0.0
  %1506 = vmatpush.msra.mxu0 0.0
  %1507 = vmatpush.msra.mxu0 0.0
  %1508 = vmatpush.msra.mxu0 0.0
  %1509 = vmatpush.msra.mxu0 0.0
  %1510 = vmatpush.msra.mxu0 0.0
  %1511 = vmatpush.msra.mxu0 0.0
  %1512 = vmatpush.msra.mxu0 0.0
  %1513 = vmatpush.msra.mxu0 %v193
  %1514 = vmatpush.msra.mxu0 %v192
  %1515 = vmatmul.f32.gmra.mxu0 %v1415
  %v1516 = vpop.f32.mrf.mxu0
  %v1517 = vadd.f32 0.0, %v1516
  %1518 = vdwg.mxu0
  %v1519 = vadd.f32 %v1498, %v1517
  %v1520 = vxor.u32 %v1519, 2147483648
  %v1521 = vmul.f32 %v1520, 1.442695
  %v1522 = vpow.pop %v1521
  %v1523 = vadd.f32 %v1522, 1.0
  %v1524 = vrcp.pop %v1523
  %v1525 = vmul.f32 %v1523, %v1524
  %v1526 = vsub.f32 1.0, %v1525
  %v1527 = vmul.f32 %v1524, %v1526
  %v1528 = vadd.f32 %v1524, %v1527
  %vm1529 = vweird.f32 %v1523
  %vm1530 = vweird.f32 %v1524
  %vm1531 = vmor %vm1529, %vm1530
  %v1532 = vsel %vm1531, %v1524, %v1528
  %v1533 = vand.u32 2147483647, %v1523
  %vm1534 = vcmp.eq.f32.partialorder %v1533, 8.507059e+37
  %v1535 = vand.u32 %v1523, 2147483648
  %v1536 = vor.u32 1.1754944e-38, %v1535
  %v1537 = vsel %vm1534, %v1536, %v1532
  %v1538 = vmul.f32 1.0, %v1537
  %v1539 = vtanh.pop %v1519
  %v1540 = vmul.f32 %v1538, %v1376
  %1542 = vrot.lane.b32.xlu0 %v1539, 96
  %v1543 = vpop.permute.xlu0 %1542
  %v1545 = vmul.f32 %v1538, %v1543
  %1547 = vrot.lane.b32.xlu0 %v1545, 16
  %v1548 = vpop.permute.xlu0 %1547
  %v1550 = vadd.f32 %v1540, %v1548
  %v1551 = vtanh.pop %v1550
  %1553 = vrot.lane.b32.xlu0 %v1551, 32
  %v1554 = vpop.permute.xlu0 %1553
  %v1556 = vmul.f32 %v1538, %v1554
  %v1557 = vld [vmem:[%s360] sm:$0x3]
  %1559 = vrot.lane.b32.xlu0 %v1497, 80
  %v1560 = vpop.permute.xlu0 %1559
  %v1561 = vsel %vm97, %v1560, 0
  %1563 = vmatpush.msra.mxu0 0.0
  %1564 = vmatpush.msra.mxu0 0.0
  %1565 = vmatpush.msra.mxu0 0.0
  %1566 = vmatpush.msra.mxu0 0.0
  %1567 = vmatpush.msra.mxu0 0.0
  %1568 = vmatpush.msra.mxu0 0.0
  %1569 = vmatpush.msra.mxu0 0.0
  %1570 = vmatpush.msra.mxu0 0.0
  %1571 = vmatpush.msra.mxu0 0.0
  %1572 = vmatpush.msra.mxu0 0.0
  %1573 = vmatpush.msra.mxu0 0.0
  %1574 = vmatpush.msra.mxu0 0.0
  %1575 = vmatpush.msra.mxu0 0.0
  %1576 = vmatpush.msra.mxu0 0.0
  %1577 = vmatpush.msra.mxu0 %v195
  %1578 = vmatpush.msra.mxu0 %v194
  %1579 = vmatmul.f32.gmra.mxu0 %v1561
  %v1580 = vpop.f32.mrf.mxu0
  %v1581 = vadd.f32 0.0, %v1580
  %1582 = vdwg.mxu0
  %v1583 = vadd.f32 %v1557, %v1581
  %1584 = vst.msk [vmem:[%s360] sm:$0x3] %vm202, %v1583
  %v1585 = vld [vmem:[%s11] sm:$0x3]
  %1587 = vrot.lane.b32.xlu0 %v1556, 80
  %v1588 = vpop.permute.xlu0 %1587
  %v1589 = vsel %vm97, %v1588, 0
  %1591 = vmatpush.msra.mxu0 0.0
  %1592 = vmatpush.msra.mxu0 0.0
  %1593 = vmatpush.msra.mxu0 0.0
  %1594 = vmatpush.msra.mxu0 0.0
  %1595 = vmatpush.msra.mxu0 0.0
  %1596 = vmatpush.msra.mxu0 0.0
  %1597 = vmatpush.msra.mxu0 0.0
  %1598 = vmatpush.msra.mxu0 0.0
  %1599 = vmatpush.msra.mxu0 0.0
  %1600 = vmatpush.msra.mxu0 0.0
  %1601 = vmatpush.msra.mxu0 0.0
  %1602 = vmatpush.msra.mxu0 0.0
  %1603 = vmatpush.msra.mxu0 0.0
  %1604 = vmatpush.msra.mxu0 0.0
  %1605 = vmatpush.msra.mxu0 %v197
  %1606 = vmatpush.msra.mxu0 %v196
  %1607 = vmatmul.f32.gmra.mxu0 %v1589
  %v1608 = vpop.f32.mrf.mxu0
  %v1609 = vadd.f32 0.0, %v1608
  %1610 = vdwg.mxu0
  %v1611 = vadd.f32 %v1585, %v1609
  %1612 = vst.msk [vmem:[%s11] sm:$0x3] %vm202, %v1611
  // Predicated region
  $region46: #{lstm_module_forward.1} parent=0 // pred_check
    _
  $region47: #{lstm_module_forward.1} parent=0 // pred_check_branch
    %1614 = sbr.rel (0) target = $region49
  $region48: #{lstm_module_forward.1} parent=0 // pred_region
    _
  $region49: #{lstm_module_forward.1} parent=0 // pred_fallthru
    _
  // Predicated region
  $region50: #{lstm_module_forward.1} parent=0 // pred_check
    _
  $region51: #{lstm_module_forward.1} parent=0 // pred_check_branch
    %1616 = sbr.rel (0) target = $region53
  $region52: #{lstm_module_forward.1} parent=0 // pred_region
    _
  $region53: #{lstm_module_forward.1} parent=0 // pred_fallthru
    _

</llo_original>
